<compile_context>
chip_gen: v6e
topology: v6e:2x2x1
jax: 0.10.0
libtpu: 0.0.40
codegen_flags: <defaults>
</compile_context>

<pallas_src>
import jax
import jax.numpy as jnp
from jax.experimental import pallas as pl
from jax.experimental.pallas import tpu as pltpu

# Module hyper-params (hidden sizes fixed by the PyTorch module).
INPUT_DIM = 32
K_PAD = 128          # first-matmul K padded to a full lane width (zeros)
H1 = 256
H2 = 512
OUTPUT_DIM = 128
LN_EPS = 1e-5        # PyTorch nn.LayerNorm default


def _round_up(n, m):
    return ((n + m - 1) // m) * m


def encoder_kernel(x_ref,
                   w1_ref, b1_ref, g1_ref, be1_ref,
                   w2_ref, b2_ref, g2_ref, be2_ref,
                   w3_ref, b3_ref, g3_ref, be3_ref,
                   o_ref):
    """One batch-tile of: (Linear -> ReLU -> LayerNorm) x 3, fully fused."""

    def block(h, w_ref, b_ref, g_ref, be_ref):
        # Linear on the MXU: cast activations to the weight dtype (bf16 by default),
        # accumulate in f32.
        y = jnp.dot(h.astype(w_ref.dtype), w_ref[...],
                    preferred_element_type=jnp.float32)
        y = y + b_ref[...]
        # ReLU (VPU, f32)
        y = jnp.maximum(y, 0.0)
        # LayerNorm over the feature (lane) axis, all statistics in f32.
        mean = jnp.mean(y, axis=-1, keepdims=True)
        var = jnp.mean(jnp.square(y - mean), axis=-1, keepdims=True)
        y_hat = (y - mean) * jax.lax.rsqrt(var + LN_EPS)
        return y_hat * g_ref[...] + be_ref[...]

    h = x_ref[...].astype(jnp.float32)
    h = block(h, w1_ref, b1_ref, g1_ref, be1_ref)
    h = block(h, w2_ref, b2_ref, g2_ref, be2_ref)
    h = block(h, w3_ref, b3_ref, g3_ref, be3_ref)
    o_ref[...] = h.astype(o_ref.dtype)


def tabular_encoder(x, params, *, batch_tile=512,
                    matmul_dtype=jnp.bfloat16,
                    vmem_limit_bytes=48 * 1024 * 1024):
    """x: [B, INPUT_DIM] float32. Returns [B, OUTPUT_DIM] float32."""
    B, D_in = x.shape
    assert D_in == INPUT_DIM
    (w1, b1, g1, be1, w2, b2, g2, be2, w3, b3, g3, be3) = params

    # --- Host-side prep -------------------------------------------------------
    # Lane-dense first matmul: zero-pad K from 32 -> 128 (x columns and W1 rows).
    xp = jnp.pad(x.astype(jnp.float32), ((0, 0), (0, K_PAD - D_in)))
    w1p = jnp.pad(w1, ((0, K_PAD - D_in), (0, 0))).astype(matmul_dtype)
    w2c = w2.astype(matmul_dtype)
    w3c = w3.astype(matmul_dtype)

    # --- Tile selection -------------------------------------------------------
    # Large tile for MXU occupancy; shrink to the batch if it is small, and try to
    # keep >= 2 grid steps so both TensorCores get work on v7x.
    tb = min(batch_tile, _round_up(B, 8))
    if B > 8 and pl.cdiv(B, tb) < 2:
        tb = _round_up(pl.cdiv(B, 2), 8)

    Bp = _round_up(B, tb)
    if Bp != B:
        # Padded rows flow through Linear/ReLU/LayerNorm harmlessly (eps keeps rsqrt
        # finite) and are sliced off below.
        xp = jnp.pad(xp, ((0, Bp - B), (0, 0)))
    grid = (Bp // tb,)

    # --- Specs ----------------------------------------------------------------
    def const_spec(shape):
        # Whole parameter as one block; constant block index => DMA'd once, reused.
        return pl.BlockSpec(shape, lambda i: (0,) * len(shape))

    in_specs = [
        pl.BlockSpec((tb, K_PAD), lambda i: (i, 0)),                     # x tile
        const_spec((K_PAD, H1)), const_spec((1, H1)),
        const_spec((1, H1)), const_spec((1, H1)),
        const_spec((H1, H2)), const_spec((1, H2)),
        const_spec((1, H2)), const_spec((1, H2)),
        const_spec((H2, OUTPUT_DIM)), const_spec((1, OUTPUT_DIM)),
        const_spec((1, OUTPUT_DIM)), const_spec((1, OUTPUT_DIM)),
    ]
    out_spec = pl.BlockSpec((tb, OUTPUT_DIM), lambda i: (i, 0))

    # --- Cost estimate (scheduler hint) ---------------------------------------
    flops = 2 * Bp * (K_PAD * H1 + H1 * H2 + H2 * OUTPUT_DIM)
    transcendentals = 3 * Bp  # one rsqrt per row per LayerNorm
    param_arrays = (w1p, w2c, w3c, b1, g1, be1, b2, g2, be2, b3, g3, be3)
    bytes_accessed = (xp.size * xp.dtype.itemsize
                      + sum(a.size * a.dtype.itemsize for a in param_arrays)
                      + Bp * OUTPUT_DIM * 4)
    cost = pl.CostEstimate(flops=flops, transcendentals=transcendentals,
                           bytes_accessed=bytes_accessed)

    out = pl.pallas_call(
        encoder_kernel,
        out_shape=jax.ShapeDtypeStruct((Bp, OUTPUT_DIM), jnp.float32),
        grid_spec=pltpu.PrefetchScalarGridSpec(
            num_scalar_prefetch=0,
            grid=grid,
            in_specs=in_specs,
            out_specs=out_spec,
        ),
        compiler_params=pltpu.CompilerParams(
            dimension_semantics=("parallel",),
            vmem_limit_bytes=vmem_limit_bytes,
        ),
        cost_estimate=cost,
    )(xp, w1p, b1, g1, be1, w2c, b2, g2, be2, w3c, b3, g3, be3)

    return out[:B]


def init_params(key):
    """Deterministic synthetic params matching the PyTorch module's shapes.

    Linear weights stored (in, out) = transpose of nn.Linear.weight.
    LayerNorm gamma=1, beta=0 (PyTorch defaults)."""
    ks = jax.random.split(key, 6)
    dims = [(INPUT_DIM, H1), (H1, H2), (H2, OUTPUT_DIM)]
    params = []
    for idx, (din, dout) in enumerate(dims):
        bound = 1.0 / jnp.sqrt(din)
        w = jax.random.uniform(ks[2 * idx], (din, dout), jnp.float32, -bound, bound)
        b = jax.random.uniform(ks[2 * idx + 1], (1, dout), jnp.float32, -bound, bound)
        g = jnp.ones((1, dout), jnp.float32)
        be = jnp.zeros((1, dout), jnp.float32)
        params += [w, b, g, be]
    return tuple(params)


def reference_forward(x, params, matmul_dtype=jnp.bfloat16):
    """Plain-JAX reference mirroring the kernel's mixed precision
    (bf16 matmul inputs, f32 accumulation, f32 LayerNorm)."""
    (w1, b1, g1, be1, w2, b2, g2, be2, w3, b3, g3, be3) = params

    def block(h, w, b, g, be):
        y = jnp.dot(h.astype(matmul_dtype), w.astype(matmul_dtype),
                    preferred_element_type=jnp.float32) + b
        y = jnp.maximum(y, 0.0)
        mean = jnp.mean(y, axis=-1, keepdims=True)
        var = jnp.mean(jnp.square(y - mean), axis=-1, keepdims=True)
        return (y - mean) * jax.lax.rsqrt(var + LN_EPS) * g + be

    h = block(x.astype(jnp.float32), w1, b1, g1, be1)
    h = block(h, w2, b2, g2, be2)
    return block(h, w3, b3, g3, be3)


if __name__ == "__main__":
    key = jax.random.PRNGKey(0)
    k_x, k_p = jax.random.split(key)

    B = 64  # small test batch; wrapper shrinks the tile and still uses a 2-step grid
    x = jax.random.normal(k_x, (B, INPUT_DIM), jnp.float32)
    params = init_params(k_p)

    out = tabular_encoder(x, params)
    out = jax.block_until_ready(out)

    ref = reference_forward(x, params)
    assert out.shape == (B, OUTPUT_DIM)
    assert jnp.max(jnp.abs(out - ref)) < 5e-3, "mismatch vs JAX reference"

    print("KERNEL_OK")
</pallas_src>

<mosaic_0001>
module attributes {stable_mosaic.version = 11 : i64} {
  func.func @encoder_kernel(%arg0: i32, %arg1: memref<32x128xf32, #tpu.memory_space<vmem>>, %arg2: memref<128x256xbf16, #tpu.memory_space<vmem>>, %arg3: memref<1x256xf32, #tpu.memory_space<vmem>>, %arg4: memref<1x256xf32, #tpu.memory_space<vmem>>, %arg5: memref<1x256xf32, #tpu.memory_space<vmem>>, %arg6: memref<256x512xbf16, #tpu.memory_space<vmem>>, %arg7: memref<1x512xf32, #tpu.memory_space<vmem>>, %arg8: memref<1x512xf32, #tpu.memory_space<vmem>>, %arg9: memref<1x512xf32, #tpu.memory_space<vmem>>, %arg10: memref<512x128xbf16, #tpu.memory_space<vmem>>, %arg11: memref<1x128xf32, #tpu.memory_space<vmem>>, %arg12: memref<1x128xf32, #tpu.memory_space<vmem>>, %arg13: memref<1x128xf32, #tpu.memory_space<vmem>>, %arg14: memref<32x128xf32, #tpu.memory_space<vmem>>) attributes {dimension_semantics = [#tpu.dimension_semantics<parallel>], iteration_bounds = array<i64: 2>, scalar_prefetch = 0 : i64, scratch_operands = 0 : i64, tpu.core_type = #tpu.core_type<tc>, window_params = [{transform_indices = @transform_0, window_bounds = array<i64: 32, 128>}, {pipeline_mode = #tpu.pipeline_mode<synchronous>, transform_indices = @transform_1, window_bounds = array<i64: 128, 256>}, {pipeline_mode = #tpu.pipeline_mode<synchronous>, transform_indices = @transform_2, window_bounds = array<i64: 1, 256>}, {pipeline_mode = #tpu.pipeline_mode<synchronous>, transform_indices = @transform_3, window_bounds = array<i64: 1, 256>}, {pipeline_mode = #tpu.pipeline_mode<synchronous>, transform_indices = @transform_4, window_bounds = array<i64: 1, 256>}, {pipeline_mode = #tpu.pipeline_mode<synchronous>, transform_indices = @transform_5, window_bounds = array<i64: 256, 512>}, {pipeline_mode = #tpu.pipeline_mode<synchronous>, transform_indices = @transform_6, window_bounds = array<i64: 1, 512>}, {pipeline_mode = #tpu.pipeline_mode<synchronous>, transform_indices = @transform_7, window_bounds = array<i64: 1, 512>}, {pipeline_mode = #tpu.pipeline_mode<synchronous>, transform_indices = @transform_8, window_bounds = array<i64: 1, 512>}, {pipeline_mode = #tpu.pipeline_mode<synchronous>, transform_indices = @transform_9, window_bounds = array<i64: 512, 128>}, {pipeline_mode = #tpu.pipeline_mode<synchronous>, transform_indices = @transform_10, window_bounds = array<i64: 1, 128>}, {pipeline_mode = #tpu.pipeline_mode<synchronous>, transform_indices = @transform_11, window_bounds = array<i64: 1, 128>}, {pipeline_mode = #tpu.pipeline_mode<synchronous>, transform_indices = @transform_12, window_bounds = array<i64: 1, 128>}, {transform_indices = @transform_13, window_bounds = array<i64: 32, 128>}]} {
    %c0 = arith.constant 0 : index
    %c0_0 = arith.constant 0 : index
    %0 = vector.load %arg1[%c0, %c0_0] : memref<32x128xf32, #tpu.memory_space<vmem>>, vector<32x128xf32>
    %1 = arith.truncf %0 : vector<32x128xf32> to vector<32x128xbf16>
    %c0_1 = arith.constant 0 : index
    %c0_2 = arith.constant 0 : index
    %2 = vector.load %arg2[%c0_1, %c0_2] : memref<128x256xbf16, #tpu.memory_space<vmem>>, vector<128x256xbf16>
    %cst = arith.constant dense<0.000000e+00> : vector<32x256xf32>
    %3 = tpu.matmul %1, %2, %cst {dimension_numbers = #tpu.dot_dimension_numbers<[1], [0], [0], [1], [0, 0, 1, 1], [], []>} : vector<32x128xbf16>, vector<128x256xbf16>, vector<32x256xf32> -> vector<32x256xf32>
    %c0_3 = arith.constant 0 : index
    %c0_4 = arith.constant 0 : index
    %4 = vector.load %arg3[%c0_3, %c0_4] : memref<1x256xf32, #tpu.memory_space<vmem>>, vector<1x256xf32>
    %5 = vector.broadcast %4 : vector<1x256xf32> to vector<32x256xf32>
    %6 = arith.addf %3, %5 : vector<32x256xf32>
    %cst_5 = arith.constant 0.000000e+00 : f32
    %7 = vector.broadcast %cst_5 : f32 to vector<32x256xf32>
    %8 = arith.maximumf %6, %7 : vector<32x256xf32>
    %cst_6 = arith.constant dense<0.000000e+00> : vector<32xf32>
    %9 = vector.multi_reduction <add>, %8, %cst_6 [1] : vector<32x256xf32> to vector<32xf32>
    %10 = vector.shape_cast %9 : vector<32xf32> to vector<32x1xf32>
    %cst_7 = arith.constant 2.560000e+02 : f32
    %11 = vector.broadcast %cst_7 : f32 to vector<32x1xf32>
    %12 = arith.divf %10, %11 : vector<32x1xf32>
    %13 = vector.broadcast %12 : vector<32x1xf32> to vector<32x256xf32>
    %14 = arith.subf %8, %13 : vector<32x256xf32>
    %15 = arith.mulf %14, %14 : vector<32x256xf32>
    %cst_8 = arith.constant dense<0.000000e+00> : vector<32xf32>
    %16 = vector.multi_reduction <add>, %15, %cst_8 [1] : vector<32x256xf32> to vector<32xf32>
    %17 = vector.shape_cast %16 : vector<32xf32> to vector<32x1xf32>
    %cst_9 = arith.constant 2.560000e+02 : f32
    %18 = vector.broadcast %cst_9 : f32 to vector<32x1xf32>
    %19 = arith.divf %17, %18 : vector<32x1xf32>
    %20 = vector.broadcast %12 : vector<32x1xf32> to vector<32x256xf32>
    %21 = arith.subf %8, %20 : vector<32x256xf32>
    %cst_10 = arith.constant 9.99999974E-6 : f32
    %22 = vector.broadcast %cst_10 : f32 to vector<32x1xf32>
    %23 = arith.addf %19, %22 : vector<32x1xf32>
    %24 = math.rsqrt %23 : vector<32x1xf32>
    %25 = vector.broadcast %24 : vector<32x1xf32> to vector<32x256xf32>
    %26 = arith.mulf %21, %25 : vector<32x256xf32>
    %c0_11 = arith.constant 0 : index
    %c0_12 = arith.constant 0 : index
    %27 = vector.load %arg4[%c0_11, %c0_12] : memref<1x256xf32, #tpu.memory_space<vmem>>, vector<1x256xf32>
    %28 = vector.broadcast %27 : vector<1x256xf32> to vector<32x256xf32>
    %29 = arith.mulf %26, %28 : vector<32x256xf32>
    %c0_13 = arith.constant 0 : index
    %c0_14 = arith.constant 0 : index
    %30 = vector.load %arg5[%c0_13, %c0_14] : memref<1x256xf32, #tpu.memory_space<vmem>>, vector<1x256xf32>
    %31 = vector.broadcast %30 : vector<1x256xf32> to vector<32x256xf32>
    %32 = arith.addf %29, %31 : vector<32x256xf32>
    %33 = arith.truncf %32 : vector<32x256xf32> to vector<32x256xbf16>
    %c0_15 = arith.constant 0 : index
    %c0_16 = arith.constant 0 : index
    %34 = vector.load %arg6[%c0_15, %c0_16] : memref<256x512xbf16, #tpu.memory_space<vmem>>, vector<256x512xbf16>
    %cst_17 = arith.constant dense<0.000000e+00> : vector<32x512xf32>
    %35 = tpu.matmul %33, %34, %cst_17 {dimension_numbers = #tpu.dot_dimension_numbers<[1], [0], [0], [1], [0, 0, 1, 1], [], []>} : vector<32x256xbf16>, vector<256x512xbf16>, vector<32x512xf32> -> vector<32x512xf32>
    %c0_18 = arith.constant 0 : index
    %c0_19 = arith.constant 0 : index
    %36 = vector.load %arg7[%c0_18, %c0_19] : memref<1x512xf32, #tpu.memory_space<vmem>>, vector<1x512xf32>
    %37 = vector.broadcast %36 : vector<1x512xf32> to vector<32x512xf32>
    %38 = arith.addf %35, %37 : vector<32x512xf32>
    %cst_20 = arith.constant 0.000000e+00 : f32
    %39 = vector.broadcast %cst_20 : f32 to vector<32x512xf32>
    %40 = arith.maximumf %38, %39 : vector<32x512xf32>
    %cst_21 = arith.constant dense<0.000000e+00> : vector<32xf32>
    %41 = vector.multi_reduction <add>, %40, %cst_21 [1] : vector<32x512xf32> to vector<32xf32>
    %42 = vector.shape_cast %41 : vector<32xf32> to vector<32x1xf32>
    %cst_22 = arith.constant 5.120000e+02 : f32
    %43 = vector.broadcast %cst_22 : f32 to vector<32x1xf32>
    %44 = arith.divf %42, %43 : vector<32x1xf32>
    %45 = vector.broadcast %44 : vector<32x1xf32> to vector<32x512xf32>
    %46 = arith.subf %40, %45 : vector<32x512xf32>
    %47 = arith.mulf %46, %46 : vector<32x512xf32>
    %cst_23 = arith.constant dense<0.000000e+00> : vector<32xf32>
    %48 = vector.multi_reduction <add>, %47, %cst_23 [1] : vector<32x512xf32> to vector<32xf32>
    %49 = vector.shape_cast %48 : vector<32xf32> to vector<32x1xf32>
    %cst_24 = arith.constant 5.120000e+02 : f32
    %50 = vector.broadcast %cst_24 : f32 to vector<32x1xf32>
    %51 = arith.divf %49, %50 : vector<32x1xf32>
    %52 = vector.broadcast %44 : vector<32x1xf32> to vector<32x512xf32>
    %53 = arith.subf %40, %52 : vector<32x512xf32>
    %cst_25 = arith.constant 9.99999974E-6 : f32
    %54 = vector.broadcast %cst_25 : f32 to vector<32x1xf32>
    %55 = arith.addf %51, %54 : vector<32x1xf32>
    %56 = math.rsqrt %55 : vector<32x1xf32>
    %57 = vector.broadcast %56 : vector<32x1xf32> to vector<32x512xf32>
    %58 = arith.mulf %53, %57 : vector<32x512xf32>
    %c0_26 = arith.constant 0 : index
    %c0_27 = arith.constant 0 : index
    %59 = vector.load %arg8[%c0_26, %c0_27] : memref<1x512xf32, #tpu.memory_space<vmem>>, vector<1x512xf32>
    %60 = vector.broadcast %59 : vector<1x512xf32> to vector<32x512xf32>
    %61 = arith.mulf %58, %60 : vector<32x512xf32>
    %c0_28 = arith.constant 0 : index
    %c0_29 = arith.constant 0 : index
    %62 = vector.load %arg9[%c0_28, %c0_29] : memref<1x512xf32, #tpu.memory_space<vmem>>, vector<1x512xf32>
    %63 = vector.broadcast %62 : vector<1x512xf32> to vector<32x512xf32>
    %64 = arith.addf %61, %63 : vector<32x512xf32>
    %65 = arith.truncf %64 : vector<32x512xf32> to vector<32x512xbf16>
    %c0_30 = arith.constant 0 : index
    %c0_31 = arith.constant 0 : index
    %66 = vector.load %arg10[%c0_30, %c0_31] : memref<512x128xbf16, #tpu.memory_space<vmem>>, vector<512x128xbf16>
    %cst_32 = arith.constant dense<0.000000e+00> : vector<32x128xf32>
    %67 = tpu.matmul %65, %66, %cst_32 {dimension_numbers = #tpu.dot_dimension_numbers<[1], [0], [0], [1], [0, 0, 1, 1], [], []>} : vector<32x512xbf16>, vector<512x128xbf16>, vector<32x128xf32> -> vector<32x128xf32>
    %c0_33 = arith.constant 0 : index
    %c0_34 = arith.constant 0 : index
    %68 = vector.load %arg11[%c0_33, %c0_34] : memref<1x128xf32, #tpu.memory_space<vmem>>, vector<1x128xf32>
    %69 = vector.broadcast %68 : vector<1x128xf32> to vector<32x128xf32>
    %70 = arith.addf %67, %69 : vector<32x128xf32>
    %cst_35 = arith.constant 0.000000e+00 : f32
    %71 = vector.broadcast %cst_35 : f32 to vector<32x128xf32>
    %72 = arith.maximumf %70, %71 : vector<32x128xf32>
    %cst_36 = arith.constant dense<0.000000e+00> : vector<32xf32>
    %73 = vector.multi_reduction <add>, %72, %cst_36 [1] : vector<32x128xf32> to vector<32xf32>
    %74 = vector.shape_cast %73 : vector<32xf32> to vector<32x1xf32>
    %cst_37 = arith.constant 1.280000e+02 : f32
    %75 = vector.broadcast %cst_37 : f32 to vector<32x1xf32>
    %76 = arith.divf %74, %75 : vector<32x1xf32>
    %77 = vector.broadcast %76 : vector<32x1xf32> to vector<32x128xf32>
    %78 = arith.subf %72, %77 : vector<32x128xf32>
    %79 = arith.mulf %78, %78 : vector<32x128xf32>
    %cst_38 = arith.constant dense<0.000000e+00> : vector<32xf32>
    %80 = vector.multi_reduction <add>, %79, %cst_38 [1] : vector<32x128xf32> to vector<32xf32>
    %81 = vector.shape_cast %80 : vector<32xf32> to vector<32x1xf32>
    %cst_39 = arith.constant 1.280000e+02 : f32
    %82 = vector.broadcast %cst_39 : f32 to vector<32x1xf32>
    %83 = arith.divf %81, %82 : vector<32x1xf32>
    %84 = vector.broadcast %76 : vector<32x1xf32> to vector<32x128xf32>
    %85 = arith.subf %72, %84 : vector<32x128xf32>
    %cst_40 = arith.constant 9.99999974E-6 : f32
    %86 = vector.broadcast %cst_40 : f32 to vector<32x1xf32>
    %87 = arith.addf %83, %86 : vector<32x1xf32>
    %88 = math.rsqrt %87 : vector<32x1xf32>
    %89 = vector.broadcast %88 : vector<32x1xf32> to vector<32x128xf32>
    %90 = arith.mulf %85, %89 : vector<32x128xf32>
    %c0_41 = arith.constant 0 : index
    %c0_42 = arith.constant 0 : index
    %91 = vector.load %arg12[%c0_41, %c0_42] : memref<1x128xf32, #tpu.memory_space<vmem>>, vector<1x128xf32>
    %92 = vector.broadcast %91 : vector<1x128xf32> to vector<32x128xf32>
    %93 = arith.mulf %90, %92 : vector<32x128xf32>
    %c0_43 = arith.constant 0 : index
    %c0_44 = arith.constant 0 : index
    %94 = vector.load %arg13[%c0_43, %c0_44] : memref<1x128xf32, #tpu.memory_space<vmem>>, vector<1x128xf32>
    %95 = vector.broadcast %94 : vector<1x128xf32> to vector<32x128xf32>
    %96 = arith.addf %93, %95 : vector<32x128xf32>
    %c0_45 = arith.constant 0 : index
    %c0_46 = arith.constant 0 : index
    %97 = vector.load %arg14[%c0_45, %c0_46] : memref<32x128xf32, #tpu.memory_space<vmem>>, vector<32x128xf32>
    tpu.vector_store %arg14[%c0_45, %c0_46], %96 {strides = array<i32>} : memref<32x128xf32, #tpu.memory_space<vmem>>, vector<32x128xf32>,
    return
  }
  func.func @transform_0(%arg0: i32) -> (i32, i32) {
    %c0_i32 = arith.constant 0 : i32
    %c0_i32_0 = arith.constant 0 : i32
    return %arg0, %c0_i32 : i32, i32
  }
  func.func @transform_1(%arg0: i32) -> (i32, i32) {
    %c0_i32 = arith.constant 0 : i32
    %c0_i32_0 = arith.constant 0 : i32
    %c0_i32_1 = arith.constant 0 : i32
    return %c0_i32, %c0_i32_0 : i32, i32
  }
  func.func @transform_2(%arg0: i32) -> (i32, i32) {
    %c0_i32 = arith.constant 0 : i32
    %c0_i32_0 = arith.constant 0 : i32
    %c0_i32_1 = arith.constant 0 : i32
    return %c0_i32, %c0_i32_0 : i32, i32
  }
  func.func @transform_3(%arg0: i32) -> (i32, i32) {
    %c0_i32 = arith.constant 0 : i32
    %c0_i32_0 = arith.constant 0 : i32
    %c0_i32_1 = arith.constant 0 : i32
    return %c0_i32, %c0_i32_0 : i32, i32
  }
  func.func @transform_4(%arg0: i32) -> (i32, i32) {
    %c0_i32 = arith.constant 0 : i32
    %c0_i32_0 = arith.constant 0 : i32
    %c0_i32_1 = arith.constant 0 : i32
    return %c0_i32, %c0_i32_0 : i32, i32
  }
  func.func @transform_5(%arg0: i32) -> (i32, i32) {
    %c0_i32 = arith.constant 0 : i32
    %c0_i32_0 = arith.constant 0 : i32
    %c0_i32_1 = arith.constant 0 : i32
    return %c0_i32, %c0_i32_0 : i32, i32
  }
  func.func @transform_6(%arg0: i32) -> (i32, i32) {
    %c0_i32 = arith.constant 0 : i32
    %c0_i32_0 = arith.constant 0 : i32
    %c0_i32_1 = arith.constant 0 : i32
    return %c0_i32, %c0_i32_0 : i32, i32
  }
  func.func @transform_7(%arg0: i32) -> (i32, i32) {
    %c0_i32 = arith.constant 0 : i32
    %c0_i32_0 = arith.constant 0 : i32
    %c0_i32_1 = arith.constant 0 : i32
    return %c0_i32, %c0_i32_0 : i32, i32
  }
  func.func @transform_8(%arg0: i32) -> (i32, i32) {
    %c0_i32 = arith.constant 0 : i32
    %c0_i32_0 = arith.constant 0 : i32
    %c0_i32_1 = arith.constant 0 : i32
    return %c0_i32, %c0_i32_0 : i32, i32
  }
  func.func @transform_9(%arg0: i32) -> (i32, i32) {
    %c0_i32 = arith.constant 0 : i32
    %c0_i32_0 = arith.constant 0 : i32
    %c0_i32_1 = arith.constant 0 : i32
    return %c0_i32, %c0_i32_0 : i32, i32
  }
  func.func @transform_10(%arg0: i32) -> (i32, i32) {
    %c0_i32 = arith.constant 0 : i32
    %c0_i32_0 = arith.constant 0 : i32
    %c0_i32_1 = arith.constant 0 : i32
    return %c0_i32, %c0_i32_0 : i32, i32
  }
  func.func @transform_11(%arg0: i32) -> (i32, i32) {
    %c0_i32 = arith.constant 0 : i32
    %c0_i32_0 = arith.constant 0 : i32
    %c0_i32_1 = arith.constant 0 : i32
    return %c0_i32, %c0_i32_0 : i32, i32
  }
  func.func @transform_12(%arg0: i32) -> (i32, i32) {
    %c0_i32 = arith.constant 0 : i32
    %c0_i32_0 = arith.constant 0 : i32
    %c0_i32_1 = arith.constant 0 : i32
    return %c0_i32, %c0_i32_0 : i32, i32
  }
  func.func @transform_13(%arg0: i32) -> (i32, i32) {
    %c0_i32 = arith.constant 0 : i32
    %c0_i32_0 = arith.constant 0 : i32
    return %arg0, %c0_i32 : i32, i32
  }
}

</mosaic_0001>

<llo_original>
// kernel: tpu_custom_call.1
$region0: #{tpu_custom_call.1}
  #allocation0 [shape = 'u32[]', space=smem, size = 0x4, offset = 0x4, fixed_abs, tag = 'smem constant byte address 0x4 - core index']
  #allocation1 [shape = 'u32[144,128]{1,0:T(1,128)}', space=vmem, size = 0x12000, scoped, tag = 'internal scratch']
  %s0 = inlined_call_operand.hbm [shape: f32[64,128], index: 0, kind: input, shape index: {}]
  %s1 = inlined_call_operand.hbm [shape: bf16[128,256], index: 1, kind: input, shape index: {}]
  %s2 = inlined_call_operand.hbm [shape: f32[1,256], index: 2, kind: input, shape index: {}]
  %s3 = inlined_call_operand.hbm [shape: f32[1,256], index: 3, kind: input, shape index: {}]
  %s4 = inlined_call_operand.hbm [shape: f32[1,256], index: 4, kind: input, shape index: {}]
  %s5 = inlined_call_operand.hbm [shape: bf16[256,512], index: 5, kind: input, shape index: {}]
  %s6 = inlined_call_operand.vmem [shape: f32[1,512], index: 6, kind: input, shape index: {}]
  %s7 = inlined_call_operand.vmem [shape: f32[1,512], index: 7, kind: input, shape index: {}]
  %s8 = inlined_call_operand.vmem [shape: f32[1,512], index: 8, kind: input, shape index: {}]
  %s9 = inlined_call_operand.hbm [shape: bf16[512,128], index: 9, kind: input, shape index: {}]
  %s10 = inlined_call_operand.vmem [shape: f32[1,128], index: 10, kind: input, shape index: {}]
  %s11 = inlined_call_operand.vmem [shape: f32[1,128], index: 11, kind: input, shape index: {}]
  %s12 = inlined_call_operand.vmem [shape: f32[1,128], index: 12, kind: input, shape index: {}]
  %s13 = inlined_call_operand.hbm [shape: f32[64,128], index: 13, kind: output, shape index: {}]
  %s14 = sld [smem:[#allocation0]]
  $region113: #{tpu_custom_call.1} parent=0
    _
  %s16 = ssub.s32 1, %s14
  %s17 = scalar_select 0, %s16, %s14
  $region1: #{tpu_custom_call.1} parent=0
    #allocation2 [shape = 'u8[32768]{0}', space=vmem, size = 0x8000, scoped, tag = 'input window, operand 0']
    #allocation3 [shape = 's32[2]{0}', space=sflag, size = 0x8, scoped, tag = 'scoped memory for tpu_custom_call.1']
    #allocation4 [shape = 's32[2]{0}', space=sflag, size = 0x8, scoped, tag = 'scoped memory for tpu_custom_call.1']
    #allocation5 [shape = 'u8[65536]{0}', space=vmem, size = 0x10000, scoped, tag = 'input window, operand 1, single buffered']
    #allocation6 [shape = 's32[1]{0}', space=sflag, size = 0x4, scoped, tag = 'scoped memory for tpu_custom_call.1']
    #allocation7 [shape = 'u8[1024]{0}', space=vmem, size = 0x400, scoped, tag = 'input window, operand 2, single buffered']
    #allocation8 [shape = 'u8[1024]{0}', space=vmem, size = 0x400, scoped, tag = 'input window, operand 3, single buffered']
    #allocation9 [shape = 's32[1]{0}', space=sflag, size = 0x4, scoped, tag = 'scoped memory for tpu_custom_call.1']
    #allocation10 [shape = 'u8[1024]{0}', space=vmem, size = 0x400, scoped, tag = 'input window, operand 4, single buffered']
    #allocation11 [shape = 'u8[262144]{0}', space=vmem, size = 0x40000, scoped, tag = 'input window, operand 5, single buffered']
    #allocation12 [shape = 's32[1]{0}', space=sflag, size = 0x4, scoped, tag = 'scoped memory for tpu_custom_call.1']
    #allocation13 [shape = 'u8[131072]{0}', space=vmem, size = 0x20000, scoped, tag = 'input window, operand 9, single buffered']
    #allocation14 [shape = 'u8[32768]{0}', space=vmem, size = 0x8000, scoped, tag = 'output window, operand 0']
    %18 = vsyncpa [#allocation3], 0
    %s19 = scalar_lea.sflag [#allocation3], 1
    %20 = vsyncpa %s19, 0
    %21 = vsyncpa [#allocation6], 0
    %22 = vsyncpa [#allocation9], 0
    %23 = vsyncpa [#allocation12], 0
    %24 = vsyncpa [#allocation4], 0
    %s25 = scalar_lea.sflag [#allocation4], 1
    %26 = vsyncpa %s25, 0
    loop: start=0, step=1, limit=4
    $region2: #{tpu_custom_call.1} parent=1 // loop_pre_header
      _
    $region3: #{tpu_custom_call.1} parent=1 // loop_header
      %s28 = sphi 0, %s32
      %p29 = scmp.ge.s32.totalorder %s28, 4
      %s38 = sphi 0, %s40
      %s41 = sphi 0, %s38
      %s42 = sphi 0, %s41
      %s58 = sphi 0, %s42
      %s62 = sphi 0, %s62
      %s64 = sphi 0, %s62
      %s65 = sphi 0, %s64
      %s79 = sphi 0, %s65
      %s83 = sphi 0, %s83
      %s85 = sphi 0, %s83
      %s86 = sphi 0, %s85
      %s100 = sphi 0, %s86
      %s104 = sphi 0, %s104
      %s106 = sphi 0, %s104
      %s107 = sphi 0, %s106
      %s121 = sphi 0, %s107
      %s125 = sphi 0, %s125
      %s127 = sphi 0, %s125
      %s128 = sphi 0, %s127
      %s142 = sphi 0, %s128
      %s146 = sphi 0, %s146
      %s148 = sphi 0, %s146
      %s149 = sphi 0, %s148
      %s163 = sphi 0, %s149
      %s167 = sphi 0, %s167
      %s169 = sphi 0, %s167
      %s170 = sphi 0, %s169
      %s184 = sphi 0, %s170
      %s188 = sphi 0, %s188
      %s190 = sphi 0, %s188
      %s191 = sphi 0, %s190
      %s205 = sphi 0, %s191
      %s209 = sphi 0, %s209
      %s211 = sphi 0, %s209
      %s212 = sphi 0, %s211
      %s226 = sphi 0, %s212
      %s230 = sphi 0, %s230
      %s232 = sphi 0, %s230
      %s233 = sphi 0, %s232
      %s247 = sphi 0, %s233
      %s251 = sphi 0, %s251
      %s253 = sphi 0, %s251
      %s254 = sphi 0, %s253
      %s268 = sphi 0, %s254
      %s272 = sphi 0, %s272
      %s274 = sphi 0, %s272
      %s275 = sphi 0, %s274
      %s289 = sphi 0, %s275
      %s293 = sphi 0, %s293
      %s295 = sphi 0, %s293
      %s296 = sphi 0, %s295
      %s310 = sphi 0, %s296
      %s316 = sphi 0, %s318
      %s319 = sphi 0, %s316
      %s320 = sphi 0, %s319
      %s336 = sphi 0, %s320
    $region4: #{tpu_custom_call.1} parent=1 // loop_header_branch
      %31 = sbr.rel (%p29) target = $region8
    $region5: #{tpu_custom_call.1} parent=1 // loop_body
      %s33 = ssub.s32 %s28, 1
      %s34 = ssub.s32 %s28, 2
      %s35 = sadd.s32 %s28, 1
      %s36 = ssub.s32 %s28, %s35
      %p37 = scmp.eq.s32.totalorder %s36, 0
      %s39 = sadd.s32 %s38, 1
      %s40 = scalar_select %p37, %s38, %s39
      %p43 = pneg %p37
      %p44 = scmp.eq.s32.totalorder %s28, 1
      %p45 = por %p43, %p44
      %p46 = scmp.ne.s32.totalorder %s38, %s41
      %p47 = scmp.eq.s32.totalorder %s28, 0
      %p48 = por %p46, %p47
      %p49 = scmp.ne.s32.totalorder %s38, %s41
      %p50 = scmp.eq.s32.totalorder %s33, 1
      %p51 = por %p49, %p50
      %p52 = scmp.ne.s32.totalorder %s41, %s42
      %p53 = scmp.eq.s32.totalorder %s33, 0
      %p54 = por %p52, %p53
      %p55 = scmp.ne.s32.totalorder %s41, %s42
      %p56 = scmp.eq.s32.totalorder %s34, 1
      %p57 = por %p55, %p56
      %p59 = scmp.ne.s32.totalorder %s42, %s58
      %p60 = scmp.eq.s32.totalorder %s34, 0
      %p61 = por %p59, %p60
      %s63 = sadd.s32 %s62, 1
      %p66 = scmp.eq.s32.totalorder %s28, 1
      %p67 = scmp.ne.s32.totalorder %s62, %s64
      %p68 = scmp.eq.s32.totalorder %s28, 0
      %p69 = por %p67, %p68
      %p70 = scmp.ne.s32.totalorder %s62, %s64
      %p71 = scmp.eq.s32.totalorder %s33, 1
      %p72 = por %p70, %p71
      %p73 = scmp.ne.s32.totalorder %s64, %s65
      %p74 = scmp.eq.s32.totalorder %s33, 0
      %p75 = por %p73, %p74
      %p76 = scmp.ne.s32.totalorder %s64, %s65
      %p77 = scmp.eq.s32.totalorder %s34, 1
      %p78 = por %p76, %p77
      %p80 = scmp.ne.s32.totalorder %s65, %s79
      %p81 = scmp.eq.s32.totalorder %s34, 0
      %p82 = por %p80, %p81
      %s84 = sadd.s32 %s83, 1
      %p87 = scmp.eq.s32.totalorder %s28, 1
      %p88 = scmp.ne.s32.totalorder %s83, %s85
      %p89 = scmp.eq.s32.totalorder %s28, 0
      %p90 = por %p88, %p89
      %p91 = scmp.ne.s32.totalorder %s83, %s85
      %p92 = scmp.eq.s32.totalorder %s33, 1
      %p93 = por %p91, %p92
      %p94 = scmp.ne.s32.totalorder %s85, %s86
      %p95 = scmp.eq.s32.totalorder %s33, 0
      %p96 = por %p94, %p95
      %p97 = scmp.ne.s32.totalorder %s85, %s86
      %p98 = scmp.eq.s32.totalorder %s34, 1
      %p99 = por %p97, %p98
      %p101 = scmp.ne.s32.totalorder %s86, %s100
      %p102 = scmp.eq.s32.totalorder %s34, 0
      %p103 = por %p101, %p102
      %s105 = sadd.s32 %s104, 1
      %p108 = scmp.eq.s32.totalorder %s28, 1
      %p109 = scmp.ne.s32.totalorder %s104, %s106
      %p110 = scmp.eq.s32.totalorder %s28, 0
      %p111 = por %p109, %p110
      %p112 = scmp.ne.s32.totalorder %s104, %s106
      %p113 = scmp.eq.s32.totalorder %s33, 1
      %p114 = por %p112, %p113
      %p115 = scmp.ne.s32.totalorder %s106, %s107
      %p116 = scmp.eq.s32.totalorder %s33, 0
      %p117 = por %p115, %p116
      %p118 = scmp.ne.s32.totalorder %s106, %s107
      %p119 = scmp.eq.s32.totalorder %s34, 1
      %p120 = por %p118, %p119
      %p122 = scmp.ne.s32.totalorder %s107, %s121
      %p123 = scmp.eq.s32.totalorder %s34, 0
      %p124 = por %p122, %p123
      %s126 = sadd.s32 %s125, 1
      %p129 = scmp.eq.s32.totalorder %s28, 1
      %p130 = scmp.ne.s32.totalorder %s125, %s127
      %p131 = scmp.eq.s32.totalorder %s28, 0
      %p132 = por %p130, %p131
      %p133 = scmp.ne.s32.totalorder %s125, %s127
      %p134 = scmp.eq.s32.totalorder %s33, 1
      %p135 = por %p133, %p134
      %p136 = scmp.ne.s32.totalorder %s127, %s128
      %p137 = scmp.eq.s32.totalorder %s33, 0
      %p138 = por %p136, %p137
      %p139 = scmp.ne.s32.totalorder %s127, %s128
      %p140 = scmp.eq.s32.totalorder %s34, 1
      %p141 = por %p139, %p140
      %p143 = scmp.ne.s32.totalorder %s128, %s142
      %p144 = scmp.eq.s32.totalorder %s34, 0
      %p145 = por %p143, %p144
      %s147 = sadd.s32 %s146, 1
      %p150 = scmp.eq.s32.totalorder %s28, 1
      %p151 = scmp.ne.s32.totalorder %s146, %s148
      %p152 = scmp.eq.s32.totalorder %s28, 0
      %p153 = por %p151, %p152
      %p154 = scmp.ne.s32.totalorder %s146, %s148
      %p155 = scmp.eq.s32.totalorder %s33, 1
      %p156 = por %p154, %p155
      %p157 = scmp.ne.s32.totalorder %s148, %s149
      %p158 = scmp.eq.s32.totalorder %s33, 0
      %p159 = por %p157, %p158
      %p160 = scmp.ne.s32.totalorder %s148, %s149
      %p161 = scmp.eq.s32.totalorder %s34, 1
      %p162 = por %p160, %p161
      %p164 = scmp.ne.s32.totalorder %s149, %s163
      %p165 = scmp.eq.s32.totalorder %s34, 0
      %p166 = por %p164, %p165
      %s168 = sadd.s32 %s167, 1
      %p171 = scmp.eq.s32.totalorder %s28, 1
      %p172 = scmp.ne.s32.totalorder %s167, %s169
      %p173 = scmp.eq.s32.totalorder %s28, 0
      %p174 = por %p172, %p173
      %p175 = scmp.ne.s32.totalorder %s167, %s169
      %p176 = scmp.eq.s32.totalorder %s33, 1
      %p177 = por %p175, %p176
      %p178 = scmp.ne.s32.totalorder %s169, %s170
      %p179 = scmp.eq.s32.totalorder %s33, 0
      %p180 = por %p178, %p179
      %p181 = scmp.ne.s32.totalorder %s169, %s170
      %p182 = scmp.eq.s32.totalorder %s34, 1
      %p183 = por %p181, %p182
      %p185 = scmp.ne.s32.totalorder %s170, %s184
      %p186 = scmp.eq.s32.totalorder %s34, 0
      %p187 = por %p185, %p186
      %s189 = sadd.s32 %s188, 1
      %p192 = scmp.eq.s32.totalorder %s28, 1
      %p193 = scmp.ne.s32.totalorder %s188, %s190
      %p194 = scmp.eq.s32.totalorder %s28, 0
      %p195 = por %p193, %p194
      %p196 = scmp.ne.s32.totalorder %s188, %s190
      %p197 = scmp.eq.s32.totalorder %s33, 1
      %p198 = por %p196, %p197
      %p199 = scmp.ne.s32.totalorder %s190, %s191
      %p200 = scmp.eq.s32.totalorder %s33, 0
      %p201 = por %p199, %p200
      %p202 = scmp.ne.s32.totalorder %s190, %s191
      %p203 = scmp.eq.s32.totalorder %s34, 1
      %p204 = por %p202, %p203
      %p206 = scmp.ne.s32.totalorder %s191, %s205
      %p207 = scmp.eq.s32.totalorder %s34, 0
      %p208 = por %p206, %p207
      %s210 = sadd.s32 %s209, 1
      %p213 = scmp.eq.s32.totalorder %s28, 1
      %p214 = scmp.ne.s32.totalorder %s209, %s211
      %p215 = scmp.eq.s32.totalorder %s28, 0
      %p216 = por %p214, %p215
      %p217 = scmp.ne.s32.totalorder %s209, %s211
      %p218 = scmp.eq.s32.totalorder %s33, 1
      %p219 = por %p217, %p218
      %p220 = scmp.ne.s32.totalorder %s211, %s212
      %p221 = scmp.eq.s32.totalorder %s33, 0
      %p222 = por %p220, %p221
      %p223 = scmp.ne.s32.totalorder %s211, %s212
      %p224 = scmp.eq.s32.totalorder %s34, 1
      %p225 = por %p223, %p224
      %p227 = scmp.ne.s32.totalorder %s212, %s226
      %p228 = scmp.eq.s32.totalorder %s34, 0
      %p229 = por %p227, %p228
      %s231 = sadd.s32 %s230, 1
      %p234 = scmp.eq.s32.totalorder %s28, 1
      %p235 = scmp.ne.s32.totalorder %s230, %s232
      %p236 = scmp.eq.s32.totalorder %s28, 0
      %p237 = por %p235, %p236
      %p238 = scmp.ne.s32.totalorder %s230, %s232
      %p239 = scmp.eq.s32.totalorder %s33, 1
      %p240 = por %p238, %p239
      %p241 = scmp.ne.s32.totalorder %s232, %s233
      %p242 = scmp.eq.s32.totalorder %s33, 0
      %p243 = por %p241, %p242
      %p244 = scmp.ne.s32.totalorder %s232, %s233
      %p245 = scmp.eq.s32.totalorder %s34, 1
      %p246 = por %p244, %p245
      %p248 = scmp.ne.s32.totalorder %s233, %s247
      %p249 = scmp.eq.s32.totalorder %s34, 0
      %p250 = por %p248, %p249
      %s252 = sadd.s32 %s251, 1
      %p255 = scmp.eq.s32.totalorder %s28, 1
      %p256 = scmp.ne.s32.totalorder %s251, %s253
      %p257 = scmp.eq.s32.totalorder %s28, 0
      %p258 = por %p256, %p257
      %p259 = scmp.ne.s32.totalorder %s251, %s253
      %p260 = scmp.eq.s32.totalorder %s33, 1
      %p261 = por %p259, %p260
      %p262 = scmp.ne.s32.totalorder %s253, %s254
      %p263 = scmp.eq.s32.totalorder %s33, 0
      %p264 = por %p262, %p263
      %p265 = scmp.ne.s32.totalorder %s253, %s254
      %p266 = scmp.eq.s32.totalorder %s34, 1
      %p267 = por %p265, %p266
      %p269 = scmp.ne.s32.totalorder %s254, %s268
      %p270 = scmp.eq.s32.totalorder %s34, 0
      %p271 = por %p269, %p270
      %s273 = sadd.s32 %s272, 1
      %p276 = scmp.eq.s32.totalorder %s28, 1
      %p277 = scmp.ne.s32.totalorder %s272, %s274
      %p278 = scmp.eq.s32.totalorder %s28, 0
      %p279 = por %p277, %p278
      %p280 = scmp.ne.s32.totalorder %s272, %s274
      %p281 = scmp.eq.s32.totalorder %s33, 1
      %p282 = por %p280, %p281
      %p283 = scmp.ne.s32.totalorder %s274, %s275
      %p284 = scmp.eq.s32.totalorder %s33, 0
      %p285 = por %p283, %p284
      %p286 = scmp.ne.s32.totalorder %s274, %s275
      %p287 = scmp.eq.s32.totalorder %s34, 1
      %p288 = por %p286, %p287
      %p290 = scmp.ne.s32.totalorder %s275, %s289
      %p291 = scmp.eq.s32.totalorder %s34, 0
      %p292 = por %p290, %p291
      %s294 = sadd.s32 %s293, 1
      %p297 = scmp.eq.s32.totalorder %s28, 1
      %p298 = scmp.ne.s32.totalorder %s293, %s295
      %p299 = scmp.eq.s32.totalorder %s28, 0
      %p300 = por %p298, %p299
      %p301 = scmp.ne.s32.totalorder %s293, %s295
      %p302 = scmp.eq.s32.totalorder %s33, 1
      %p303 = por %p301, %p302
      %p304 = scmp.ne.s32.totalorder %s295, %s296
      %p305 = scmp.eq.s32.totalorder %s33, 0
      %p306 = por %p304, %p305
      %p307 = scmp.ne.s32.totalorder %s295, %s296
      %p308 = scmp.eq.s32.totalorder %s34, 1
      %p309 = por %p307, %p308
      %p311 = scmp.ne.s32.totalorder %s296, %s310
      %p312 = scmp.eq.s32.totalorder %s34, 0
      %p313 = por %p311, %p312
      %s314 = ssub.s32 %s28, %s35
      %p315 = scmp.eq.s32.totalorder %s314, 0
      %s317 = sadd.s32 %s316, 1
      %s318 = scalar_select %p315, %s316, %s317
      %p321 = pneg %p315
      %p322 = scmp.eq.s32.totalorder %s28, 1
      %p323 = por %p321, %p322
      %p324 = scmp.ne.s32.totalorder %s316, %s319
      %p325 = scmp.eq.s32.totalorder %s28, 0
      %p326 = por %p324, %p325
      %p327 = scmp.ne.s32.totalorder %s316, %s319
      %p328 = scmp.eq.s32.totalorder %s33, 1
      %p329 = por %p327, %p328
      %p330 = scmp.ne.s32.totalorder %s319, %s320
      %p331 = scmp.eq.s32.totalorder %s33, 0
      %p332 = por %p330, %p331
      %p333 = scmp.ne.s32.totalorder %s319, %s320
      %p334 = scmp.eq.s32.totalorder %s34, 1
      %p335 = por %p333, %p334
      %p337 = scmp.ne.s32.totalorder %s320, %s336
      %p338 = scmp.eq.s32.totalorder %s34, 0
      %p339 = por %p337, %p338
      %p340 = scmp.le.s32.totalorder 1, %s28
      %p341 = scmp.lt.s32.totalorder %s28, 3
      %p342 = pnand %p340, %p341
      %p343 = pneg %p342
      // Predicated region
      $region9: #{tpu_custom_call.1} parent=5 // pred_check
        _
      $region10: #{tpu_custom_call.1} parent=5 // pred_check_branch
        %345 = sbr.rel (%p342) target = $region12
      $region11: #{tpu_custom_call.1} parent=5 // pred_region
        %s346 = ssub.s32 %s28, 1
        // Predicated region
        $region13: #{tpu_custom_call.1} parent=11 // pred_check
          %p347 = pneg %p75
        $region14: #{tpu_custom_call.1} parent=11 // pred_check_branch
          %349 = sbr.rel (%p347) target = $region16
        $region15: #{tpu_custom_call.1} parent=11 // pred_region
          %s351 = ssub.s32 2048, 2048
          %352 = vsyncadd [#allocation6], %s351
          %s353 = sshll.u32 [#allocation5], 4
          %s354 = int_to_ptr.vmem [resolvable:$true] %s353
          %359 = dma.hbm_to_vmem [thread:$0]  %s1, 2048, %s354, [#allocation6], 128, 128, 8
        $region16: #{tpu_custom_call.1} parent=11 // pred_fallthru
          _
        // Predicated region
        $region17: #{tpu_custom_call.1} parent=11 // pred_check
          %p360 = pneg %p96
        $region18: #{tpu_custom_call.1} parent=11 // pred_check_branch
          %362 = sbr.rel (%p360) target = $region20
        $region19: #{tpu_custom_call.1} parent=11 // pred_region
          %s364 = ssub.s32 32, 32
          %365 = vsyncadd [#allocation6], %s364
          %s367 = sshll.u32 [#allocation7], 4
          %s368 = int_to_ptr.vmem [resolvable:$true] %s367
          %370 = dma.hbm_to_vmem [thread:$0]  %s2, 32, %s368, [#allocation6]
        $region20: #{tpu_custom_call.1} parent=11 // pred_fallthru
          _
        // Predicated region
        $region21: #{tpu_custom_call.1} parent=11 // pred_check
          %p371 = pneg %p117
        $region22: #{tpu_custom_call.1} parent=11 // pred_check_branch
          %373 = sbr.rel (%p371) target = $region24
        $region23: #{tpu_custom_call.1} parent=11 // pred_region
          %s375 = ssub.s32 32, 32
          %376 = vsyncadd [#allocation9], %s375
          %s378 = sshll.u32 [#allocation8], 4
          %s379 = int_to_ptr.vmem [resolvable:$true] %s378
          %381 = dma.hbm_to_vmem [thread:$0]  %s3, 32, %s379, [#allocation9]
        $region24: #{tpu_custom_call.1} parent=11 // pred_fallthru
          _
        // Predicated region
        $region25: #{tpu_custom_call.1} parent=11 // pred_check
          %p382 = pneg %p138
        $region26: #{tpu_custom_call.1} parent=11 // pred_check_branch
          %384 = sbr.rel (%p382) target = $region28
        $region27: #{tpu_custom_call.1} parent=11 // pred_region
          %s386 = ssub.s32 32, 32
          %387 = vsyncadd [#allocation9], %s386
          %s389 = sshll.u32 [#allocation10], 4
          %s390 = int_to_ptr.vmem [resolvable:$true] %s389
          %392 = dma.hbm_to_vmem [thread:$0]  %s4, 32, %s390, [#allocation9]
        $region28: #{tpu_custom_call.1} parent=11 // pred_fallthru
          _
        // Predicated region
        $region29: #{tpu_custom_call.1} parent=11 // pred_check
          %p393 = pneg %p159
        $region30: #{tpu_custom_call.1} parent=11 // pred_check_branch
          %395 = sbr.rel (%p393) target = $region32
        $region31: #{tpu_custom_call.1} parent=11 // pred_region
          %s397 = ssub.s32 8192, 8192
          %398 = vsyncadd [#allocation12], %s397
          %s399 = sshll.u32 [#allocation11], 4
          %s400 = int_to_ptr.vmem [resolvable:$true] %s399
          %405 = dma.hbm_to_vmem [thread:$0]  %s5, 8192, %s400, [#allocation12], 256, 256, 16
        $region32: #{tpu_custom_call.1} parent=11 // pred_fallthru
          _
        // Predicated region
        $region33: #{tpu_custom_call.1} parent=11 // pred_check
          %p406 = pneg %p180
        $region34: #{tpu_custom_call.1} parent=11 // pred_check_branch
          %408 = sbr.rel (%p406) target = $region36
        $region35: #{tpu_custom_call.1} parent=11 // pred_region
          _
        $region36: #{tpu_custom_call.1} parent=11 // pred_fallthru
          _
        // Predicated region
        $region37: #{tpu_custom_call.1} parent=11 // pred_check
          %p409 = pneg %p201
        $region38: #{tpu_custom_call.1} parent=11 // pred_check_branch
          %411 = sbr.rel (%p409) target = $region40
        $region39: #{tpu_custom_call.1} parent=11 // pred_region
          _
        $region40: #{tpu_custom_call.1} parent=11 // pred_fallthru
          _
        // Predicated region
        $region41: #{tpu_custom_call.1} parent=11 // pred_check
          %p412 = pneg %p222
        $region42: #{tpu_custom_call.1} parent=11 // pred_check_branch
          %414 = sbr.rel (%p412) target = $region44
        $region43: #{tpu_custom_call.1} parent=11 // pred_region
          _
        $region44: #{tpu_custom_call.1} parent=11 // pred_fallthru
          _
        // Predicated region
        $region45: #{tpu_custom_call.1} parent=11 // pred_check
          %p415 = pneg %p243
        $region46: #{tpu_custom_call.1} parent=11 // pred_check_branch
          %417 = sbr.rel (%p415) target = $region48
        $region47: #{tpu_custom_call.1} parent=11 // pred_region
          %s419 = ssub.s32 4096, 4096
          %420 = vsyncadd [#allocation12], %s419
          %s421 = sshll.u32 [#allocation13], 4
          %s422 = int_to_ptr.vmem [resolvable:$true] %s421
          %427 = dma.hbm_to_vmem [thread:$0]  %s9, 4096, %s422, [#allocation12], 64, 64, 4
        $region48: #{tpu_custom_call.1} parent=11 // pred_fallthru
          _
        // Predicated region
        $region49: #{tpu_custom_call.1} parent=11 // pred_check
          %p428 = pneg %p264
        $region50: #{tpu_custom_call.1} parent=11 // pred_check_branch
          %430 = sbr.rel (%p428) target = $region52
        $region51: #{tpu_custom_call.1} parent=11 // pred_region
          _
        $region52: #{tpu_custom_call.1} parent=11 // pred_fallthru
          _
        // Predicated region
        $region53: #{tpu_custom_call.1} parent=11 // pred_check
          %p431 = pneg %p285
        $region54: #{tpu_custom_call.1} parent=11 // pred_check_branch
          %433 = sbr.rel (%p431) target = $region56
        $region55: #{tpu_custom_call.1} parent=11 // pred_region
          _
        $region56: #{tpu_custom_call.1} parent=11 // pred_fallthru
          _
        // Predicated region
        $region57: #{tpu_custom_call.1} parent=11 // pred_check
          %p434 = pneg %p306
        $region58: #{tpu_custom_call.1} parent=11 // pred_check_branch
          %436 = sbr.rel (%p434) target = $region60
        $region59: #{tpu_custom_call.1} parent=11 // pred_region
          _
        $region60: #{tpu_custom_call.1} parent=11 // pred_fallthru
          _
      $region12: #{tpu_custom_call.1} parent=5 // pred_fallthru
        _
      %p437 = scmp.lt.s32.totalorder %s28, 2
      // Predicated region
      $region61: #{tpu_custom_call.1} parent=5 // pred_check
        %p438 = pneg %p437
      $region62: #{tpu_custom_call.1} parent=5 // pred_check_branch
        %440 = sbr.rel (%p438) target = $region64
      $region63: #{tpu_custom_call.1} parent=5 // pred_region
        // Predicated region
        $region65: #{tpu_custom_call.1} parent=63 // pred_check
          %p441 = pneg %p48
        $region66: #{tpu_custom_call.1} parent=63 // pred_check_branch
          %443 = sbr.rel (%p441) target = $region68
        $region67: #{tpu_custom_call.1} parent=63 // pred_region
          %s444 = sand.u32 %s38, 1
          %s445 = scalar_lea.sflag [#allocation3], %s444
          %s446 = sand.u32 %s38, 1
          %s447 = smul.addr %s446, 32
          %s448 = scalar_lea.vmem [#allocation2], %s447
          %s449 = smul.u32 4, %s28
          %s451 = ssub.s32 512, 512
          %452 = vsyncadd %s445, %s451
          %s453 = smul.addr %s449, 128
          %s454 = scalar_lea.hbm %s0, %s453
          %s455 = sshll.u32 %s448, 4
          %s456 = int_to_ptr.vmem [resolvable:$true] %s455
          %461 = dma.hbm_to_vmem [thread:$0]  %s454, 512, %s456, %s445, 128, 128, 8
        $region68: #{tpu_custom_call.1} parent=63 // pred_fallthru
          _
      $region64: #{tpu_custom_call.1} parent=5 // pred_fallthru
        _
      %p462 = scmp.le.s32.totalorder 1, %s28
      %p463 = scmp.lt.s32.totalorder %s28, 3
      %p464 = pnand %p462, %p463
      %p465 = pneg %p464
      // Predicated region
      $region69: #{tpu_custom_call.1} parent=5 // pred_check
        _
      $region70: #{tpu_custom_call.1} parent=5 // pred_check_branch
        %467 = sbr.rel (%p464) target = $region72
      $region71: #{tpu_custom_call.1} parent=5 // pred_region
        %s468 = ssub.s32 %s28, 1
        %s469 = sand.u32 %s41, 1
        %s470 = scalar_lea.sflag [#allocation3], %s469
        %s471 = sand.u32 %s41, 1
        %s472 = smul.addr %s471, 32
        %s473 = scalar_lea.vmem [#allocation2], %s472
        // Predicated region
        $region73: #{tpu_custom_call.1} parent=71 // pred_check
          %p474 = pneg %p54
        $region74: #{tpu_custom_call.1} parent=71 // pred_check_branch
          %476 = sbr.rel (%p474) target = $region76
        $region75: #{tpu_custom_call.1} parent=71 // pred_region
          %477 = dma.done %s470, 512
        $region76: #{tpu_custom_call.1} parent=71 // pred_fallthru
          _
        // Predicated region
        $region77: #{tpu_custom_call.1} parent=71 // pred_check
          %p478 = pneg %p75
        $region78: #{tpu_custom_call.1} parent=71 // pred_check_branch
          %480 = sbr.rel (%p478) target = $region80
        $region79: #{tpu_custom_call.1} parent=71 // pred_region
          %481 = dma.done [#allocation6], 2048
        $region80: #{tpu_custom_call.1} parent=71 // pred_fallthru
          _
        // Predicated region
        $region81: #{tpu_custom_call.1} parent=71 // pred_check
          %p482 = pneg %p96
        $region82: #{tpu_custom_call.1} parent=71 // pred_check_branch
          %484 = sbr.rel (%p482) target = $region84
        $region83: #{tpu_custom_call.1} parent=71 // pred_region
          %485 = dma.done [#allocation6], 32
        $region84: #{tpu_custom_call.1} parent=71 // pred_fallthru
          _
        // Predicated region
        $region85: #{tpu_custom_call.1} parent=71 // pred_check
          %p486 = pneg %p117
        $region86: #{tpu_custom_call.1} parent=71 // pred_check_branch
          %488 = sbr.rel (%p486) target = $region88
        $region87: #{tpu_custom_call.1} parent=71 // pred_region
          %489 = dma.done [#allocation9], 32
        $region88: #{tpu_custom_call.1} parent=71 // pred_fallthru
          _
        // Predicated region
        $region89: #{tpu_custom_call.1} parent=71 // pred_check
          %p490 = pneg %p138
        $region90: #{tpu_custom_call.1} parent=71 // pred_check_branch
          %492 = sbr.rel (%p490) target = $region92
        $region91: #{tpu_custom_call.1} parent=71 // pred_region
          %493 = dma.done [#allocation9], 32
        $region92: #{tpu_custom_call.1} parent=71 // pred_fallthru
          _
        // Predicated region
        $region93: #{tpu_custom_call.1} parent=71 // pred_check
          %p494 = pneg %p159
        $region94: #{tpu_custom_call.1} parent=71 // pred_check_branch
          %496 = sbr.rel (%p494) target = $region96
        $region95: #{tpu_custom_call.1} parent=71 // pred_region
          %497 = dma.done [#allocation12], 8192
        $region96: #{tpu_custom_call.1} parent=71 // pred_fallthru
          _
        // Predicated region
        $region97: #{tpu_custom_call.1} parent=71 // pred_check
          %p498 = pneg %p243
        $region98: #{tpu_custom_call.1} parent=71 // pred_check_branch
          %500 = sbr.rel (%p498) target = $region100
        $region99: #{tpu_custom_call.1} parent=71 // pred_region
          %501 = dma.done [#allocation12], 4096
        $region100: #{tpu_custom_call.1} parent=71 // pred_fallthru
          _
        %s502 = sand.u32 %s41, 1
        %s503 = scalar_lea.sflag [#allocation3], %s502
        %s504 = sand.u32 %s41, 1
        %s505 = smul.addr %s504, 32
        %s506 = scalar_lea.vmem [#allocation2], %s505
        %p507 = pneg %p54
        %p508 = pneg %p51
        %p509 = pneg %p75
        %p510 = pneg %p72
        %p511 = pneg %p96
        %p512 = pneg %p93
        %p513 = pneg %p117
        %p514 = pneg %p114
        %p515 = pneg %p138
        %p516 = pneg %p135
        %p517 = pneg %p159
        %p518 = pneg %p156
        %p519 = pneg %p180
        %p520 = pneg %p177
        %p521 = pneg %p201
        %p522 = pneg %p198
        %p523 = pneg %p222
        %p524 = pneg %p219
        %p525 = pneg %p243
        %p526 = pneg %p240
        %p527 = pneg %p264
        %p528 = pneg %p261
        %p529 = pneg %p285
        %p530 = pneg %p282
        %p531 = pneg %p306
        %p532 = pneg %p303
        %p533 = pneg %p332
        %p534 = pneg %p329
        %s535 = sand.u32 %s319, 1
        %s536 = scalar_lea.sflag [#allocation4], %s535
        %s537 = sand.u32 %s319, 1
        %s538 = smul.addr %s537, 32
        %s539 = scalar_lea.vmem [#allocation14], %s538
        %s540 = smul.u32 4, %s33
        %s541 = smul.u32 4, %s33
        %v543 = vld [vmem:[%s473] sm:$0xff]
        %v544 = vld [vmem:[%s473 + $0x8] sm:$0xff]
        %v545 = vld [vmem:[%s473 + $0x10] sm:$0xff]
        %v546 = vld [vmem:[%s473 + $0x18] sm:$0xff]
        %v547 = vpack.c.bf16 %v544, %v543
        %v548 = vpack.c.bf16 %v546, %v545
        %v549 = vld [vmem:[#allocation5] sm:$0xff]
        %v550 = vld [vmem:[#allocation5 + $0x8] sm:$0xff]
        %v551 = vld [vmem:[#allocation5 + $0x10] sm:$0xff]
        %v552 = vld [vmem:[#allocation5 + $0x18] sm:$0xff]
        %v553 = vld [vmem:[#allocation5 + $0x20] sm:$0xff]
        %v554 = vld [vmem:[#allocation5 + $0x28] sm:$0xff]
        %v555 = vld [vmem:[#allocation5 + $0x30] sm:$0xff]
        %v556 = vld [vmem:[#allocation5 + $0x38] sm:$0xff]
        %v557 = vld [vmem:[#allocation5 + $0x40] sm:$0xff]
        %v558 = vld [vmem:[#allocation5 + $0x48] sm:$0xff]
        %v559 = vld [vmem:[#allocation5 + $0x50] sm:$0xff]
        %v560 = vld [vmem:[#allocation5 + $0x58] sm:$0xff]
        %v561 = vld [vmem:[#allocation5 + $0x60] sm:$0xff]
        %v562 = vld [vmem:[#allocation5 + $0x68] sm:$0xff]
        %v563 = vld [vmem:[#allocation5 + $0x70] sm:$0xff]
        %v564 = vld [vmem:[#allocation5 + $0x78] sm:$0xff]
        %v565 = vld [vmem:[#allocation7] sm:$0x3]
        %v567 = vlaneseq
        %v568 = vshrl.u32 %v567, 7
        %v569 = vsub.s32 0, %v568
        %v570 = vrot.slane %v565, %v569
        %v571 = vlaneseq
        %v572 = vshrl.u32 %v571, 7
        %v573 = vsub.s32 1, %v572
        %v574 = vrot.slane %v565, %v573
        %v593 = vunpack.c.l.b16 %v549
        %v594 = vunpack.c.h.b16 %v549
        %v595 = vunpack.c.l.b16 %v550
        %v596 = vunpack.c.h.b16 %v550
        %v597 = vunpack.c.l.b16 %v551
        %v598 = vunpack.c.h.b16 %v551
        %v599 = vunpack.c.l.b16 %v552
        %v600 = vunpack.c.h.b16 %v552
        %v601 = vunpack.c.l.b16 %v553
        %v602 = vunpack.c.h.b16 %v553
        %v603 = vunpack.c.l.b16 %v554
        %v604 = vunpack.c.h.b16 %v554
        %v605 = vunpack.c.l.b16 %v555
        %v606 = vunpack.c.h.b16 %v555
        %v607 = vunpack.c.l.b16 %v556
        %v608 = vunpack.c.h.b16 %v556
        %v609 = vunpack.c.l.b16 %v557
        %v610 = vunpack.c.h.b16 %v557
        %v611 = vunpack.c.l.b16 %v558
        %v612 = vunpack.c.h.b16 %v558
        %v613 = vunpack.c.l.b16 %v559
        %v614 = vunpack.c.h.b16 %v559
        %v615 = vunpack.c.l.b16 %v560
        %v616 = vunpack.c.h.b16 %v560
        %v617 = vunpack.c.l.b16 %v561
        %v618 = vunpack.c.h.b16 %v561
        %v619 = vunpack.c.l.b16 %v562
        %v620 = vunpack.c.h.b16 %v562
        %v621 = vunpack.c.l.b16 %v563
        %v622 = vunpack.c.h.b16 %v563
        %v623 = vunpack.c.l.b16 %v564
        %v624 = vunpack.c.h.b16 %v564
        %v625 = vpack.c.b16 %v595, %v593
        %v626 = vpack.c.b16 %v596, %v594
        %v627 = vpack.c.b16 %v599, %v597
        %v628 = vpack.c.b16 %v600, %v598
        %v629 = vpack.c.b16 %v603, %v601
        %v630 = vpack.c.b16 %v604, %v602
        %v631 = vpack.c.b16 %v607, %v605
        %v632 = vpack.c.b16 %v608, %v606
        %v633 = vpack.c.b16 %v611, %v609
        %v634 = vpack.c.b16 %v612, %v610
        %v635 = vpack.c.b16 %v615, %v613
        %v636 = vpack.c.b16 %v616, %v614
        %v637 = vpack.c.b16 %v619, %v617
        %v638 = vpack.c.b16 %v620, %v618
        %v639 = vpack.c.b16 %v623, %v621
        %v640 = vpack.c.b16 %v624, %v622
        %657 = vmatprep.subr.bf16.mxu0 %v640
        %658 = vmatpush1.bf16.msra.mxu0 %v639
        %659 = vmatprep.subr.bf16.mxu0 %v638
        %660 = vmatpush1.bf16.msra.mxu0 %v637
        %661 = vmatprep.subr.bf16.mxu0 %v636
        %662 = vmatpush1.bf16.msra.mxu0 %v635
        %663 = vmatprep.subr.bf16.mxu0 %v634
        %664 = vmatpush1.bf16.msra.mxu0 %v633
        %665 = vmatprep.subr.bf16.mxu0 %v632
        %666 = vmatpush1.bf16.msra.mxu0 %v631
        %667 = vmatprep.subr.bf16.mxu0 %v630
        %668 = vmatpush1.bf16.msra.mxu0 %v629
        %669 = vmatprep.subr.bf16.mxu0 %v628
        %670 = vmatpush1.bf16.msra.mxu0 %v627
        %671 = vmatprep.subr.bf16.mxu0 %v626
        %672 = vmatpush1.bf16.msra.mxu0 %v625
        %673 = vmatprep.subr.bf16.mxu0 0
        %674 = vmatpush2.bf16.msra.mxu0 0
        %675 = vmatprep.subr.bf16.mxu0 0
        %676 = vmatpush2.bf16.msra.mxu0 0
        %677 = vmatprep.subr.bf16.mxu0 0
        %678 = vmatpush2.bf16.msra.mxu0 0
        %679 = vmatprep.subr.bf16.mxu0 0
        %680 = vmatpush2.bf16.msra.mxu0 0
        %681 = vmatprep.subr.bf16.mxu0 0
        %682 = vmatpush2.bf16.msra.mxu0 0
        %683 = vmatprep.subr.bf16.mxu0 0
        %684 = vmatpush2.bf16.msra.mxu0 0
        %685 = vmatprep.subr.bf16.mxu0 0
        %686 = vmatpush2.bf16.msra.mxu0 0
        %687 = vmatprep.subr.bf16.mxu0 0
        %688 = vmatpush2.bf16.msra.mxu0 0
        %689 = vmatprep.mubr.bf16.mxu0 0
        %690 = vmatmul.mubr.bf16.gmra.mxu0 %v547
        %v691 = vpop.f32.mrf.mxu0
        %v692 = vadd.f32 %v570, %v691
        %v693 = vpop.f32.mrf.mxu0
        %v694 = vadd.f32 %v574, %v693
        %v695 = vpop.f32.mrf.mxu0
        %v696 = vadd.f32 %v570, %v695
        %v697 = vpop.f32.mrf.mxu0
        %v698 = vadd.f32 %v574, %v697
        %699 = vmatprep.mubr.bf16.mxu0 0
        %700 = vmatmul.mubr.bf16.gmra.mxu0 %v548
        %v701 = vpop.f32.mrf.mxu0
        %v702 = vadd.f32 %v570, %v701
        %v703 = vpop.f32.mrf.mxu0
        %v704 = vadd.f32 %v574, %v703
        %v705 = vpop.f32.mrf.mxu0
        %v706 = vadd.f32 %v570, %v705
        %v707 = vpop.f32.mrf.mxu0
        %v708 = vadd.f32 %v574, %v707
        %709 = vdwg.mxu0
        %v710 = vmax.f32 %v692, 0.0
        %v711 = vmax.f32 %v694, 0.0
        %v712 = vmax.f32 %v696, 0.0
        %v713 = vmax.f32 %v698, 0.0
        %v714 = vmax.f32 %v702, 0.0
        %v715 = vmax.f32 %v704, 0.0
        %v716 = vmax.f32 %v706, 0.0
        %v717 = vmax.f32 %v708, 0.0
        %v718 = vadd.f32 %v710, %v711
        %719 = vadd.xlane.f32.xlu0 %v718
        %v720 = vpop.xlane.xlu0 %719
        %v721 = vadd.f32 %v712, %v713
        %722 = vadd.xlane.f32.xlu0 %v721
        %v723 = vpop.xlane.xlu0 %722
        %v724 = vadd.f32 %v714, %v715
        %725 = vadd.xlane.f32.xlu0 %v724
        %v726 = vpop.xlane.xlu0 %725
        %v727 = vadd.f32 %v716, %v717
        %728 = vadd.xlane.f32.xlu0 %v727
        %v729 = vpop.xlane.xlu0 %728
        %v730 = vrcp.pop 256.0
        %v731 = vmul.f32 %v720, %v730
        %v732 = vmul.f32 %v723, %v730
        %v733 = vmul.f32 %v726, %v730
        %v734 = vmul.f32 %v729, %v730
        %v735 = vsub.f32 %v710, %v731
        %v736 = vsub.f32 %v711, %v731
        %v737 = vsub.f32 %v712, %v732
        %v738 = vsub.f32 %v713, %v732
        %v739 = vsub.f32 %v714, %v733
        %v740 = vsub.f32 %v715, %v733
        %v741 = vsub.f32 %v716, %v734
        %v742 = vsub.f32 %v717, %v734
        %v743 = vmul.f32 %v735, %v735
        %v744 = vmul.f32 %v736, %v736
        %v745 = vmul.f32 %v737, %v737
        %v746 = vmul.f32 %v738, %v738
        %v747 = vmul.f32 %v739, %v739
        %v748 = vmul.f32 %v740, %v740
        %v749 = vmul.f32 %v741, %v741
        %v750 = vmul.f32 %v742, %v742
        %v751 = vadd.f32 %v743, %v744
        %752 = vadd.xlane.f32.xlu0 %v751
        %v753 = vpop.xlane.xlu0 %752
        %v754 = vadd.f32 %v745, %v746
        %755 = vadd.xlane.f32.xlu0 %v754
        %v756 = vpop.xlane.xlu0 %755
        %v757 = vadd.f32 %v747, %v748
        %758 = vadd.xlane.f32.xlu0 %v757
        %v759 = vpop.xlane.xlu0 %758
        %v760 = vadd.f32 %v749, %v750
        %761 = vadd.xlane.f32.xlu0 %v760
        %v762 = vpop.xlane.xlu0 %761
        %v763 = vmul.f32 %v753, %v730
        %v764 = vmul.f32 %v756, %v730
        %v765 = vmul.f32 %v759, %v730
        %v766 = vmul.f32 %v762, %v730
        %v767 = vadd.f32 %v763, 1e-05
        %v768 = vadd.f32 %v764, 1e-05
        %v769 = vadd.f32 %v765, 1e-05
        %v770 = vadd.f32 %v766, 1e-05
        %v771 = vrsqrt.pop %v767
        %v772 = vrsqrt.pop %v768
        %v773 = vrsqrt.pop %v769
        %v774 = vrsqrt.pop %v770
        %v775 = vmul.f32 %v735, %v771
        %v776 = vmul.f32 %v736, %v771
        %v777 = vmul.f32 %v737, %v772
        %v778 = vmul.f32 %v738, %v772
        %v779 = vmul.f32 %v739, %v773
        %v780 = vmul.f32 %v740, %v773
        %v781 = vmul.f32 %v741, %v774
        %v782 = vmul.f32 %v742, %v774
        %v783 = vld [vmem:[#allocation8] sm:$0x3]
        %v785 = vlaneseq
        %v786 = vshrl.u32 %v785, 7
        %v787 = vsub.s32 0, %v786
        %v788 = vrot.slane %v783, %v787
        %v789 = vlaneseq
        %v790 = vshrl.u32 %v789, 7
        %v791 = vsub.s32 1, %v790
        %v792 = vrot.slane %v783, %v791
        %v795 = vmul.f32 %v775, %v788
        %v796 = vmul.f32 %v776, %v792
        %v797 = vmul.f32 %v777, %v788
        %v798 = vmul.f32 %v778, %v792
        %v799 = vmul.f32 %v779, %v788
        %v800 = vmul.f32 %v780, %v792
        %v801 = vmul.f32 %v781, %v788
        %v802 = vmul.f32 %v782, %v792
        %v803 = vld [vmem:[#allocation10] sm:$0x3]
        %v805 = vlaneseq
        %v806 = vshrl.u32 %v805, 7
        %v807 = vsub.s32 0, %v806
        %v808 = vrot.slane %v803, %v807
        %v809 = vlaneseq
        %v810 = vshrl.u32 %v809, 7
        %v811 = vsub.s32 1, %v810
        %v812 = vrot.slane %v803, %v811
        %v815 = vadd.f32 %v795, %v808
        %v816 = vadd.f32 %v796, %v812
        %v817 = vadd.f32 %v797, %v808
        %v818 = vadd.f32 %v798, %v812
        %v819 = vadd.f32 %v799, %v808
        %v820 = vadd.f32 %v800, %v812
        %v821 = vadd.f32 %v801, %v808
        %v822 = vadd.f32 %v802, %v812
        %v823 = vpack.c.bf16 %v817, %v815
        %v824 = vpack.c.bf16 %v818, %v816
        %v825 = vpack.c.bf16 %v821, %v819
        %v826 = vpack.c.bf16 %v822, %v820
        %v827 = vld [vmem:[#allocation11] sm:$0xff]
        %v828 = vld [vmem:[#allocation11 + $0x8] sm:$0xff]
        %v829 = vld [vmem:[#allocation11 + $0x10] sm:$0xff]
        %v830 = vld [vmem:[#allocation11 + $0x18] sm:$0xff]
        %v831 = vld [vmem:[#allocation11 + $0x20] sm:$0xff]
        %v832 = vld [vmem:[#allocation11 + $0x28] sm:$0xff]
        %v833 = vld [vmem:[#allocation11 + $0x30] sm:$0xff]
        %v834 = vld [vmem:[#allocation11 + $0x38] sm:$0xff]
        %v835 = vld [vmem:[#allocation11 + $0x40] sm:$0xff]
        %v836 = vld [vmem:[#allocation11 + $0x48] sm:$0xff]
        %v837 = vld [vmem:[#allocation11 + $0x50] sm:$0xff]
        %v838 = vld [vmem:[#allocation11 + $0x58] sm:$0xff]
        %v839 = vld [vmem:[#allocation11 + $0x60] sm:$0xff]
        %v840 = vld [vmem:[#allocation11 + $0x68] sm:$0xff]
        %v841 = vld [vmem:[#allocation11 + $0x70] sm:$0xff]
        %v842 = vld [vmem:[#allocation11 + $0x78] sm:$0xff]
        %v843 = vld [vmem:[#allocation11 + $0x80] sm:$0xff]
        %v844 = vld [vmem:[#allocation11 + $0x88] sm:$0xff]
        %v845 = vld [vmem:[#allocation11 + $0x90] sm:$0xff]
        %v846 = vld [vmem:[#allocation11 + $0x98] sm:$0xff]
        %v847 = vld [vmem:[#allocation11 + $0xa0] sm:$0xff]
        %v848 = vld [vmem:[#allocation11 + $0xa8] sm:$0xff]
        %v849 = vld [vmem:[#allocation11 + $0xb0] sm:$0xff]
        %v850 = vld [vmem:[#allocation11 + $0xb8] sm:$0xff]
        %v851 = vld [vmem:[#allocation11 + $0xc0] sm:$0xff]
        %v852 = vld [vmem:[#allocation11 + $0xc8] sm:$0xff]
        %v853 = vld [vmem:[#allocation11 + $0xd0] sm:$0xff]
        %v854 = vld [vmem:[#allocation11 + $0xd8] sm:$0xff]
        %v855 = vld [vmem:[#allocation11 + $0xe0] sm:$0xff]
        %v856 = vld [vmem:[#allocation11 + $0xe8] sm:$0xff]
        %v857 = vld [vmem:[#allocation11 + $0xf0] sm:$0xff]
        %v858 = vld [vmem:[#allocation11 + $0xf8] sm:$0xff]
        %v859 = vld [vmem:[#allocation11 + $0x100] sm:$0xff]
        %v860 = vld [vmem:[#allocation11 + $0x108] sm:$0xff]
        %v861 = vld [vmem:[#allocation11 + $0x110] sm:$0xff]
        %v862 = vld [vmem:[#allocation11 + $0x118] sm:$0xff]
        %v863 = vld [vmem:[#allocation11 + $0x120] sm:$0xff]
        %v864 = vld [vmem:[#allocation11 + $0x128] sm:$0xff]
        %v865 = vld [vmem:[#allocation11 + $0x130] sm:$0xff]
        %v866 = vld [vmem:[#allocation11 + $0x138] sm:$0xff]
        %v867 = vld [vmem:[#allocation11 + $0x140] sm:$0xff]
        %v868 = vld [vmem:[#allocation11 + $0x148] sm:$0xff]
        %v869 = vld [vmem:[#allocation11 + $0x150] sm:$0xff]
        %v870 = vld [vmem:[#allocation11 + $0x158] sm:$0xff]
        %v871 = vld [vmem:[#allocation11 + $0x160] sm:$0xff]
        %v872 = vld [vmem:[#allocation11 + $0x168] sm:$0xff]
        %v873 = vld [vmem:[#allocation11 + $0x170] sm:$0xff]
        %v874 = vld [vmem:[#allocation11 + $0x178] sm:$0xff]
        %v875 = vld [vmem:[#allocation11 + $0x180] sm:$0xff]
        %v876 = vld [vmem:[#allocation11 + $0x188] sm:$0xff]
        %v877 = vld [vmem:[#allocation11 + $0x190] sm:$0xff]
        %v878 = vld [vmem:[#allocation11 + $0x198] sm:$0xff]
        %v879 = vld [vmem:[#allocation11 + $0x1a0] sm:$0xff]
        %v880 = vld [vmem:[#allocation11 + $0x1a8] sm:$0xff]
        %v881 = vld [vmem:[#allocation11 + $0x1b0] sm:$0xff]
        %v882 = vld [vmem:[#allocation11 + $0x1b8] sm:$0xff]
        %v883 = vld [vmem:[#allocation11 + $0x1c0] sm:$0xff]
        %v884 = vld [vmem:[#allocation11 + $0x1c8] sm:$0xff]
        %v885 = vld [vmem:[#allocation11 + $0x1d0] sm:$0xff]
        %v886 = vld [vmem:[#allocation11 + $0x1d8] sm:$0xff]
        %v887 = vld [vmem:[#allocation11 + $0x1e0] sm:$0xff]
        %v888 = vld [vmem:[#allocation11 + $0x1e8] sm:$0xff]
        %v889 = vld [vmem:[#allocation11 + $0x1f0] sm:$0xff]
        %v890 = vld [vmem:[#allocation11 + $0x1f8] sm:$0xff]
        %v891 = vld [vmem:[%s6] sm:$0xf]
        %v893 = vlaneseq
        %v894 = vshrl.u32 %v893, 7
        %v895 = vsub.s32 0, %v894
        %v896 = vrot.slane %v891, %v895
        %v897 = vlaneseq
        %v898 = vshrl.u32 %v897, 7
        %v899 = vsub.s32 1, %v898
        %v900 = vrot.slane %v891, %v899
        %v901 = vlaneseq
        %v902 = vshrl.u32 %v901, 7
        %v903 = vsub.s32 2, %v902
        %v904 = vrot.slane %v891, %v903
        %v905 = vlaneseq
        %v906 = vshrl.u32 %v905, 7
        %v907 = vsub.s32 3, %v906
        %v908 = vrot.slane %v891, %v907
        %v977 = vunpack.c.l.b16 %v827
        %v978 = vunpack.c.h.b16 %v827
        %v979 = vunpack.c.l.b16 %v828
        %v980 = vunpack.c.h.b16 %v828
        %v981 = vunpack.c.l.b16 %v829
        %v982 = vunpack.c.h.b16 %v829
        %v983 = vunpack.c.l.b16 %v830
        %v984 = vunpack.c.h.b16 %v830
        %v985 = vunpack.c.l.b16 %v831
        %v986 = vunpack.c.h.b16 %v831
        %v987 = vunpack.c.l.b16 %v832
        %v988 = vunpack.c.h.b16 %v832
        %v989 = vunpack.c.l.b16 %v833
        %v990 = vunpack.c.h.b16 %v833
        %v991 = vunpack.c.l.b16 %v834
        %v992 = vunpack.c.h.b16 %v834
        %v993 = vunpack.c.l.b16 %v835
        %v994 = vunpack.c.h.b16 %v835
        %v995 = vunpack.c.l.b16 %v836
        %v996 = vunpack.c.h.b16 %v836
        %v997 = vunpack.c.l.b16 %v837
        %v998 = vunpack.c.h.b16 %v837
        %v999 = vunpack.c.l.b16 %v838
        %v1000 = vunpack.c.h.b16 %v838
        %v1001 = vunpack.c.l.b16 %v839
        %v1002 = vunpack.c.h.b16 %v839
        %v1003 = vunpack.c.l.b16 %v840
        %v1004 = vunpack.c.h.b16 %v840
        %v1005 = vunpack.c.l.b16 %v841
        %v1006 = vunpack.c.h.b16 %v841
        %v1007 = vunpack.c.l.b16 %v842
        %v1008 = vunpack.c.h.b16 %v842
        %v1009 = vunpack.c.l.b16 %v843
        %v1010 = vunpack.c.h.b16 %v843
        %v1011 = vunpack.c.l.b16 %v844
        %v1012 = vunpack.c.h.b16 %v844
        %v1013 = vunpack.c.l.b16 %v845
        %v1014 = vunpack.c.h.b16 %v845
        %v1015 = vunpack.c.l.b16 %v846
        %v1016 = vunpack.c.h.b16 %v846
        %v1017 = vunpack.c.l.b16 %v847
        %v1018 = vunpack.c.h.b16 %v847
        %v1019 = vunpack.c.l.b16 %v848
        %v1020 = vunpack.c.h.b16 %v848
        %v1021 = vunpack.c.l.b16 %v849
        %v1022 = vunpack.c.h.b16 %v849
        %v1023 = vunpack.c.l.b16 %v850
        %v1024 = vunpack.c.h.b16 %v850
        %v1025 = vunpack.c.l.b16 %v851
        %v1026 = vunpack.c.h.b16 %v851
        %v1027 = vunpack.c.l.b16 %v852
        %v1028 = vunpack.c.h.b16 %v852
        %v1029 = vunpack.c.l.b16 %v853
        %v1030 = vunpack.c.h.b16 %v853
        %v1031 = vunpack.c.l.b16 %v854
        %v1032 = vunpack.c.h.b16 %v854
        %v1033 = vunpack.c.l.b16 %v855
        %v1034 = vunpack.c.h.b16 %v855
        %v1035 = vunpack.c.l.b16 %v856
        %v1036 = vunpack.c.h.b16 %v856
        %v1037 = vunpack.c.l.b16 %v857
        %v1038 = vunpack.c.h.b16 %v857
        %v1039 = vunpack.c.l.b16 %v858
        %v1040 = vunpack.c.h.b16 %v858
        %v1041 = vunpack.c.l.b16 %v859
        %v1042 = vunpack.c.h.b16 %v859
        %v1043 = vunpack.c.l.b16 %v860
        %v1044 = vunpack.c.h.b16 %v860
        %v1045 = vunpack.c.l.b16 %v861
        %v1046 = vunpack.c.h.b16 %v861
        %v1047 = vunpack.c.l.b16 %v862
        %v1048 = vunpack.c.h.b16 %v862
        %v1049 = vunpack.c.l.b16 %v863
        %v1050 = vunpack.c.h.b16 %v863
        %v1051 = vunpack.c.l.b16 %v864
        %v1052 = vunpack.c.h.b16 %v864
        %v1053 = vunpack.c.l.b16 %v865
        %v1054 = vunpack.c.h.b16 %v865
        %v1055 = vunpack.c.l.b16 %v866
        %v1056 = vunpack.c.h.b16 %v866
        %v1057 = vunpack.c.l.b16 %v867
        %v1058 = vunpack.c.h.b16 %v867
        %v1059 = vunpack.c.l.b16 %v868
        %v1060 = vunpack.c.h.b16 %v868
        %v1061 = vunpack.c.l.b16 %v869
        %v1062 = vunpack.c.h.b16 %v869
        %v1063 = vunpack.c.l.b16 %v870
        %v1064 = vunpack.c.h.b16 %v870
        %v1065 = vunpack.c.l.b16 %v871
        %v1066 = vunpack.c.h.b16 %v871
        %v1067 = vunpack.c.l.b16 %v872
        %v1068 = vunpack.c.h.b16 %v872
        %v1069 = vunpack.c.l.b16 %v873
        %v1070 = vunpack.c.h.b16 %v873
        %v1071 = vunpack.c.l.b16 %v874
        %v1072 = vunpack.c.h.b16 %v874
        %v1073 = vunpack.c.l.b16 %v875
        %v1074 = vunpack.c.h.b16 %v875
        %v1075 = vunpack.c.l.b16 %v876
        %v1076 = vunpack.c.h.b16 %v876
        %v1077 = vunpack.c.l.b16 %v877
        %v1078 = vunpack.c.h.b16 %v877
        %v1079 = vunpack.c.l.b16 %v878
        %v1080 = vunpack.c.h.b16 %v878
        %v1081 = vunpack.c.l.b16 %v879
        %v1082 = vunpack.c.h.b16 %v879
        %v1083 = vunpack.c.l.b16 %v880
        %v1084 = vunpack.c.h.b16 %v880
        %v1085 = vunpack.c.l.b16 %v881
        %v1086 = vunpack.c.h.b16 %v881
        %v1087 = vunpack.c.l.b16 %v882
        %v1088 = vunpack.c.h.b16 %v882
        %v1089 = vunpack.c.l.b16 %v883
        %v1090 = vunpack.c.h.b16 %v883
        %v1091 = vunpack.c.l.b16 %v884
        %v1092 = vunpack.c.h.b16 %v884
        %v1093 = vunpack.c.l.b16 %v885
        %v1094 = vunpack.c.h.b16 %v885
        %v1095 = vunpack.c.l.b16 %v886
        %v1096 = vunpack.c.h.b16 %v886
        %v1097 = vunpack.c.l.b16 %v887
        %v1098 = vunpack.c.h.b16 %v887
        %v1099 = vunpack.c.l.b16 %v888
        %v1100 = vunpack.c.h.b16 %v888
        %v1101 = vunpack.c.l.b16 %v889
        %v1102 = vunpack.c.h.b16 %v889
        %v1103 = vunpack.c.l.b16 %v890
        %v1104 = vunpack.c.h.b16 %v890
        %v1105 = vpack.c.b16 %v981, %v977
        %v1106 = vpack.c.b16 %v982, %v978
        %v1107 = vpack.c.b16 %v983, %v979
        %v1108 = vpack.c.b16 %v984, %v980
        %v1109 = vpack.c.b16 %v989, %v985
        %v1110 = vpack.c.b16 %v990, %v986
        %v1111 = vpack.c.b16 %v991, %v987
        %v1112 = vpack.c.b16 %v992, %v988
        %v1113 = vpack.c.b16 %v997, %v993
        %v1114 = vpack.c.b16 %v998, %v994
        %v1115 = vpack.c.b16 %v999, %v995
        %v1116 = vpack.c.b16 %v1000, %v996
        %v1117 = vpack.c.b16 %v1005, %v1001
        %v1118 = vpack.c.b16 %v1006, %v1002
        %v1119 = vpack.c.b16 %v1007, %v1003
        %v1120 = vpack.c.b16 %v1008, %v1004
        %v1121 = vpack.c.b16 %v1013, %v1009
        %v1122 = vpack.c.b16 %v1014, %v1010
        %v1123 = vpack.c.b16 %v1015, %v1011
        %v1124 = vpack.c.b16 %v1016, %v1012
        %v1125 = vpack.c.b16 %v1021, %v1017
        %v1126 = vpack.c.b16 %v1022, %v1018
        %v1127 = vpack.c.b16 %v1023, %v1019
        %v1128 = vpack.c.b16 %v1024, %v1020
        %v1129 = vpack.c.b16 %v1029, %v1025
        %v1130 = vpack.c.b16 %v1030, %v1026
        %v1131 = vpack.c.b16 %v1031, %v1027
        %v1132 = vpack.c.b16 %v1032, %v1028
        %v1133 = vpack.c.b16 %v1037, %v1033
        %v1134 = vpack.c.b16 %v1038, %v1034
        %v1135 = vpack.c.b16 %v1039, %v1035
        %v1136 = vpack.c.b16 %v1040, %v1036
        %v1137 = vpack.c.b16 %v1045, %v1041
        %v1138 = vpack.c.b16 %v1046, %v1042
        %v1139 = vpack.c.b16 %v1047, %v1043
        %v1140 = vpack.c.b16 %v1048, %v1044
        %v1141 = vpack.c.b16 %v1053, %v1049
        %v1142 = vpack.c.b16 %v1054, %v1050
        %v1143 = vpack.c.b16 %v1055, %v1051
        %v1144 = vpack.c.b16 %v1056, %v1052
        %v1145 = vpack.c.b16 %v1061, %v1057
        %v1146 = vpack.c.b16 %v1062, %v1058
        %v1147 = vpack.c.b16 %v1063, %v1059
        %v1148 = vpack.c.b16 %v1064, %v1060
        %v1149 = vpack.c.b16 %v1069, %v1065
        %v1150 = vpack.c.b16 %v1070, %v1066
        %v1151 = vpack.c.b16 %v1071, %v1067
        %v1152 = vpack.c.b16 %v1072, %v1068
        %v1153 = vpack.c.b16 %v1077, %v1073
        %v1154 = vpack.c.b16 %v1078, %v1074
        %v1155 = vpack.c.b16 %v1079, %v1075
        %v1156 = vpack.c.b16 %v1080, %v1076
        %v1157 = vpack.c.b16 %v1085, %v1081
        %v1158 = vpack.c.b16 %v1086, %v1082
        %v1159 = vpack.c.b16 %v1087, %v1083
        %v1160 = vpack.c.b16 %v1088, %v1084
        %v1161 = vpack.c.b16 %v1093, %v1089
        %v1162 = vpack.c.b16 %v1094, %v1090
        %v1163 = vpack.c.b16 %v1095, %v1091
        %v1164 = vpack.c.b16 %v1096, %v1092
        %v1165 = vpack.c.b16 %v1101, %v1097
        %v1166 = vpack.c.b16 %v1102, %v1098
        %v1167 = vpack.c.b16 %v1103, %v1099
        %v1168 = vpack.c.b16 %v1104, %v1100
        %1233 = vmatprep.subr.bf16.mxu0 %v1134
        %1234 = vmatpush1.bf16.msra.mxu0 %v1133
        %1235 = vmatprep.subr.bf16.mxu0 %v1130
        %1236 = vmatpush1.bf16.msra.mxu0 %v1129
        %1237 = vmatprep.subr.bf16.mxu0 %v1126
        %1238 = vmatpush1.bf16.msra.mxu0 %v1125
        %1239 = vmatprep.subr.bf16.mxu0 %v1122
        %1240 = vmatpush1.bf16.msra.mxu0 %v1121
        %1241 = vmatprep.subr.bf16.mxu0 %v1118
        %1242 = vmatpush1.bf16.msra.mxu0 %v1117
        %1243 = vmatprep.subr.bf16.mxu0 %v1114
        %1244 = vmatpush1.bf16.msra.mxu0 %v1113
        %1245 = vmatprep.subr.bf16.mxu0 %v1110
        %1246 = vmatpush1.bf16.msra.mxu0 %v1109
        %1247 = vmatprep.subr.bf16.mxu0 %v1106
        %1248 = vmatpush1.bf16.msra.mxu0 %v1105
        %1249 = vmatprep.subr.bf16.mxu0 %v1166
        %1250 = vmatpush2.bf16.msra.mxu0 %v1165
        %1251 = vmatprep.subr.bf16.mxu0 %v1162
        %1252 = vmatpush2.bf16.msra.mxu0 %v1161
        %1253 = vmatprep.subr.bf16.mxu0 %v1158
        %1254 = vmatpush2.bf16.msra.mxu0 %v1157
        %1255 = vmatprep.subr.bf16.mxu0 %v1154
        %1256 = vmatpush2.bf16.msra.mxu0 %v1153
        %1257 = vmatprep.subr.bf16.mxu0 %v1150
        %1258 = vmatpush2.bf16.msra.mxu0 %v1149
        %1259 = vmatprep.subr.bf16.mxu0 %v1146
        %1260 = vmatpush2.bf16.msra.mxu0 %v1145
        %1261 = vmatprep.subr.bf16.mxu0 %v1142
        %1262 = vmatpush2.bf16.msra.mxu0 %v1141
        %1263 = vmatprep.subr.bf16.mxu0 %v1138
        %1264 = vmatpush2.bf16.msra.mxu0 %v1137
        %1265 = vmatprep.mubr.bf16.mxu0 %v824
        %1266 = vmatmul.mubr.bf16.gmra.mxu0 %v823
        %v1267 = vpop.f32.mrf.mxu0
        %v1268 = vadd.f32 %v896, %v1267
        %v1269 = vpop.f32.mrf.mxu0
        %v1270 = vadd.f32 %v900, %v1269
        %v1271 = vpop.f32.mrf.mxu0
        %v1272 = vadd.f32 %v896, %v1271
        %v1273 = vpop.f32.mrf.mxu0
        %v1274 = vadd.f32 %v900, %v1273
        %1275 = vmatprep.mubr.bf16.mxu0 %v826
        %1276 = vmatmul.mubr.bf16.gmra.mxu0 %v825
        %v1277 = vpop.f32.mrf.mxu0
        %v1278 = vadd.f32 %v896, %v1277
        %v1279 = vpop.f32.mrf.mxu0
        %v1280 = vadd.f32 %v900, %v1279
        %v1281 = vpop.f32.mrf.mxu0
        %v1282 = vadd.f32 %v896, %v1281
        %v1283 = vpop.f32.mrf.mxu0
        %v1284 = vadd.f32 %v900, %v1283
        %1285 = vdwg.mxu0
        %1286 = vmatprep.subr.bf16.mxu0 %v1136
        %1287 = vmatpush1.bf16.msra.mxu0 %v1135
        %1288 = vmatprep.subr.bf16.mxu0 %v1132
        %1289 = vmatpush1.bf16.msra.mxu0 %v1131
        %1290 = vmatprep.subr.bf16.mxu0 %v1128
        %1291 = vmatpush1.bf16.msra.mxu0 %v1127
        %1292 = vmatprep.subr.bf16.mxu0 %v1124
        %1293 = vmatpush1.bf16.msra.mxu0 %v1123
        %1294 = vmatprep.subr.bf16.mxu0 %v1120
        %1295 = vmatpush1.bf16.msra.mxu0 %v1119
        %1296 = vmatprep.subr.bf16.mxu0 %v1116
        %1297 = vmatpush1.bf16.msra.mxu0 %v1115
        %1298 = vmatprep.subr.bf16.mxu0 %v1112
        %1299 = vmatpush1.bf16.msra.mxu0 %v1111
        %1300 = vmatprep.subr.bf16.mxu0 %v1108
        %1301 = vmatpush1.bf16.msra.mxu0 %v1107
        %1302 = vmatprep.subr.bf16.mxu0 %v1168
        %1303 = vmatpush2.bf16.msra.mxu0 %v1167
        %1304 = vmatprep.subr.bf16.mxu0 %v1164
        %1305 = vmatpush2.bf16.msra.mxu0 %v1163
        %1306 = vmatprep.subr.bf16.mxu0 %v1160
        %1307 = vmatpush2.bf16.msra.mxu0 %v1159
        %1308 = vmatprep.subr.bf16.mxu0 %v1156
        %1309 = vmatpush2.bf16.msra.mxu0 %v1155
        %1310 = vmatprep.subr.bf16.mxu0 %v1152
        %1311 = vmatpush2.bf16.msra.mxu0 %v1151
        %1312 = vmatprep.subr.bf16.mxu0 %v1148
        %1313 = vmatpush2.bf16.msra.mxu0 %v1147
        %1314 = vmatprep.subr.bf16.mxu0 %v1144
        %1315 = vmatpush2.bf16.msra.mxu0 %v1143
        %1316 = vmatprep.subr.bf16.mxu0 %v1140
        %1317 = vmatpush2.bf16.msra.mxu0 %v1139
        %1318 = vmatprep.mubr.bf16.mxu0 %v824
        %1319 = vmatmul.mubr.bf16.gmra.mxu0 %v823
        %v1320 = vpop.f32.mrf.mxu0
        %v1321 = vadd.f32 %v904, %v1320
        %v1322 = vpop.f32.mrf.mxu0
        %v1323 = vadd.f32 %v908, %v1322
        %v1324 = vpop.f32.mrf.mxu0
        %v1325 = vadd.f32 %v904, %v1324
        %v1326 = vpop.f32.mrf.mxu0
        %v1327 = vadd.f32 %v908, %v1326
        %1328 = vmatprep.mubr.bf16.mxu0 %v826
        %1329 = vmatmul.mubr.bf16.gmra.mxu0 %v825
        %v1330 = vpop.f32.mrf.mxu0
        %v1331 = vadd.f32 %v904, %v1330
        %v1332 = vpop.f32.mrf.mxu0
        %v1333 = vadd.f32 %v908, %v1332
        %v1334 = vpop.f32.mrf.mxu0
        %v1335 = vadd.f32 %v904, %v1334
        %v1336 = vpop.f32.mrf.mxu0
        %v1337 = vadd.f32 %v908, %v1336
        %1338 = vdwg.mxu0
        %v1339 = vmax.f32 %v1268, 0.0
        %v1340 = vmax.f32 %v1270, 0.0
        %v1341 = vmax.f32 %v1321, 0.0
        %v1342 = vmax.f32 %v1323, 0.0
        %v1343 = vmax.f32 %v1272, 0.0
        %v1344 = vmax.f32 %v1274, 0.0
        %v1345 = vmax.f32 %v1325, 0.0
        %v1346 = vmax.f32 %v1327, 0.0
        %v1347 = vmax.f32 %v1278, 0.0
        %v1348 = vmax.f32 %v1280, 0.0
        %v1349 = vmax.f32 %v1331, 0.0
        %v1350 = vmax.f32 %v1333, 0.0
        %v1351 = vmax.f32 %v1282, 0.0
        %v1352 = vmax.f32 %v1284, 0.0
        %v1353 = vmax.f32 %v1335, 0.0
        %v1354 = vmax.f32 %v1337, 0.0
        %v1355 = vadd.f32 %v1339, %v1340
        %v1356 = vadd.f32 %v1355, %v1341
        %v1357 = vadd.f32 %v1356, %v1342
        %1358 = vadd.xlane.f32.xlu0 %v1357
        %v1359 = vpop.xlane.xlu0 %1358
        %v1360 = vadd.f32 %v1343, %v1344
        %v1361 = vadd.f32 %v1360, %v1345
        %v1362 = vadd.f32 %v1361, %v1346
        %1363 = vadd.xlane.f32.xlu0 %v1362
        %v1364 = vpop.xlane.xlu0 %1363
        %v1365 = vadd.f32 %v1347, %v1348
        %v1366 = vadd.f32 %v1365, %v1349
        %v1367 = vadd.f32 %v1366, %v1350
        %1368 = vadd.xlane.f32.xlu0 %v1367
        %v1369 = vpop.xlane.xlu0 %1368
        %v1370 = vadd.f32 %v1351, %v1352
        %v1371 = vadd.f32 %v1370, %v1353
        %v1372 = vadd.f32 %v1371, %v1354
        %1373 = vadd.xlane.f32.xlu0 %v1372
        %v1374 = vpop.xlane.xlu0 %1373
        %v1375 = vrcp.pop 512.0
        %v1376 = vmul.f32 %v1359, %v1375
        %v1377 = vmul.f32 %v1364, %v1375
        %v1378 = vmul.f32 %v1369, %v1375
        %v1379 = vmul.f32 %v1374, %v1375
        %v1380 = vsub.f32 %v1339, %v1376
        %v1381 = vsub.f32 %v1340, %v1376
        %v1382 = vsub.f32 %v1341, %v1376
        %v1383 = vsub.f32 %v1342, %v1376
        %v1384 = vsub.f32 %v1343, %v1377
        %v1385 = vsub.f32 %v1344, %v1377
        %v1386 = vsub.f32 %v1345, %v1377
        %v1387 = vsub.f32 %v1346, %v1377
        %v1388 = vsub.f32 %v1347, %v1378
        %v1389 = vsub.f32 %v1348, %v1378
        %v1390 = vsub.f32 %v1349, %v1378
        %v1391 = vsub.f32 %v1350, %v1378
        %v1392 = vsub.f32 %v1351, %v1379
        %v1393 = vsub.f32 %v1352, %v1379
        %v1394 = vsub.f32 %v1353, %v1379
        %v1395 = vsub.f32 %v1354, %v1379
        %v1396 = vmul.f32 %v1380, %v1380
        %v1397 = vmul.f32 %v1381, %v1381
        %v1398 = vmul.f32 %v1382, %v1382
        %v1399 = vmul.f32 %v1383, %v1383
        %v1400 = vmul.f32 %v1384, %v1384
        %v1401 = vmul.f32 %v1385, %v1385
        %v1402 = vmul.f32 %v1386, %v1386
        %v1403 = vmul.f32 %v1387, %v1387
        %v1404 = vmul.f32 %v1388, %v1388
        %v1405 = vmul.f32 %v1389, %v1389
        %v1406 = vmul.f32 %v1390, %v1390
        %v1407 = vmul.f32 %v1391, %v1391
        %v1408 = vmul.f32 %v1392, %v1392
        %v1409 = vmul.f32 %v1393, %v1393
        %v1410 = vmul.f32 %v1394, %v1394
        %v1411 = vmul.f32 %v1395, %v1395
        %v1412 = vadd.f32 %v1396, %v1397
        %v1413 = vadd.f32 %v1412, %v1398
        %v1414 = vadd.f32 %v1413, %v1399
        %1415 = vadd.xlane.f32.xlu0 %v1414
        %v1416 = vpop.xlane.xlu0 %1415
        %v1417 = vadd.f32 %v1400, %v1401
        %v1418 = vadd.f32 %v1417, %v1402
        %v1419 = vadd.f32 %v1418, %v1403
        %1420 = vadd.xlane.f32.xlu0 %v1419
        %v1421 = vpop.xlane.xlu0 %1420
        %v1422 = vadd.f32 %v1404, %v1405
        %v1423 = vadd.f32 %v1422, %v1406
        %v1424 = vadd.f32 %v1423, %v1407
        %1425 = vadd.xlane.f32.xlu0 %v1424
        %v1426 = vpop.xlane.xlu0 %1425
        %v1427 = vadd.f32 %v1408, %v1409
        %v1428 = vadd.f32 %v1427, %v1410
        %v1429 = vadd.f32 %v1428, %v1411
        %1430 = vadd.xlane.f32.xlu0 %v1429
        %v1431 = vpop.xlane.xlu0 %1430
        %v1432 = vmul.f32 %v1416, %v1375
        %v1433 = vmul.f32 %v1421, %v1375
        %v1434 = vmul.f32 %v1426, %v1375
        %v1435 = vmul.f32 %v1431, %v1375
        %v1436 = vadd.f32 %v1432, 1e-05
        %v1437 = vadd.f32 %v1433, 1e-05
        %v1438 = vadd.f32 %v1434, 1e-05
        %v1439 = vadd.f32 %v1435, 1e-05
        %v1440 = vrsqrt.pop %v1436
        %v1441 = vrsqrt.pop %v1437
        %v1442 = vrsqrt.pop %v1438
        %v1443 = vrsqrt.pop %v1439
        %v1444 = vmul.f32 %v1380, %v1440
        %v1445 = vmul.f32 %v1381, %v1440
        %v1446 = vmul.f32 %v1382, %v1440
        %v1447 = vmul.f32 %v1383, %v1440
        %v1448 = vmul.f32 %v1384, %v1441
        %v1449 = vmul.f32 %v1385, %v1441
        %v1450 = vmul.f32 %v1386, %v1441
        %v1451 = vmul.f32 %v1387, %v1441
        %v1452 = vmul.f32 %v1388, %v1442
        %v1453 = vmul.f32 %v1389, %v1442
        %v1454 = vmul.f32 %v1390, %v1442
        %v1455 = vmul.f32 %v1391, %v1442
        %v1456 = vmul.f32 %v1392, %v1443
        %v1457 = vmul.f32 %v1393, %v1443
        %v1458 = vmul.f32 %v1394, %v1443
        %v1459 = vmul.f32 %v1395, %v1443
        %v1460 = vld [vmem:[%s7] sm:$0xf]
        %v1462 = vlaneseq
        %v1463 = vshrl.u32 %v1462, 7
        %v1464 = vsub.s32 0, %v1463
        %v1465 = vrot.slane %v1460, %v1464
        %v1466 = vlaneseq
        %v1467 = vshrl.u32 %v1466, 7
        %v1468 = vsub.s32 1, %v1467
        %v1469 = vrot.slane %v1460, %v1468
        %v1470 = vlaneseq
        %v1471 = vshrl.u32 %v1470, 7
        %v1472 = vsub.s32 2, %v1471
        %v1473 = vrot.slane %v1460, %v1472
        %v1474 = vlaneseq
        %v1475 = vshrl.u32 %v1474, 7
        %v1476 = vsub.s32 3, %v1475
        %v1477 = vrot.slane %v1460, %v1476
        %v1482 = vmul.f32 %v1444, %v1465
        %v1483 = vmul.f32 %v1445, %v1469
        %v1484 = vmul.f32 %v1446, %v1473
        %v1485 = vmul.f32 %v1447, %v1477
        %v1486 = vmul.f32 %v1448, %v1465
        %v1487 = vmul.f32 %v1449, %v1469
        %v1488 = vmul.f32 %v1450, %v1473
        %v1489 = vmul.f32 %v1451, %v1477
        %v1490 = vmul.f32 %v1452, %v1465
        %v1491 = vmul.f32 %v1453, %v1469
        %v1492 = vmul.f32 %v1454, %v1473
        %v1493 = vmul.f32 %v1455, %v1477
        %v1494 = vmul.f32 %v1456, %v1465
        %v1495 = vmul.f32 %v1457, %v1469
        %v1496 = vmul.f32 %v1458, %v1473
        %v1497 = vmul.f32 %v1459, %v1477
        %v1498 = vld [vmem:[%s8] sm:$0xf]
        %v1500 = vlaneseq
        %v1501 = vshrl.u32 %v1500, 7
        %v1502 = vsub.s32 0, %v1501
        %v1503 = vrot.slane %v1498, %v1502
        %v1504 = vlaneseq
        %v1505 = vshrl.u32 %v1504, 7
        %v1506 = vsub.s32 1, %v1505
        %v1507 = vrot.slane %v1498, %v1506
        %v1508 = vlaneseq
        %v1509 = vshrl.u32 %v1508, 7
        %v1510 = vsub.s32 2, %v1509
        %v1511 = vrot.slane %v1498, %v1510
        %v1512 = vlaneseq
        %v1513 = vshrl.u32 %v1512, 7
        %v1514 = vsub.s32 3, %v1513
        %v1515 = vrot.slane %v1498, %v1514
        %v1520 = vadd.f32 %v1482, %v1503
        %v1521 = vadd.f32 %v1483, %v1507
        %v1522 = vadd.f32 %v1484, %v1511
        %v1523 = vadd.f32 %v1485, %v1515
        %v1524 = vadd.f32 %v1486, %v1503
        %v1525 = vadd.f32 %v1487, %v1507
        %v1526 = vadd.f32 %v1488, %v1511
        %v1527 = vadd.f32 %v1489, %v1515
        %v1528 = vadd.f32 %v1490, %v1503
        %v1529 = vadd.f32 %v1491, %v1507
        %v1530 = vadd.f32 %v1492, %v1511
        %v1531 = vadd.f32 %v1493, %v1515
        %v1532 = vadd.f32 %v1494, %v1503
        %v1533 = vadd.f32 %v1495, %v1507
        %v1534 = vadd.f32 %v1496, %v1511
        %v1535 = vadd.f32 %v1497, %v1515
        %v1536 = vpack.c.bf16 %v1524, %v1520
        %v1537 = vpack.c.bf16 %v1525, %v1521
        %v1538 = vpack.c.bf16 %v1526, %v1522
        %v1539 = vpack.c.bf16 %v1527, %v1523
        %v1540 = vpack.c.bf16 %v1532, %v1528
        %v1541 = vpack.c.bf16 %v1533, %v1529
        %v1542 = vpack.c.bf16 %v1534, %v1530
        %v1543 = vpack.c.bf16 %v1535, %v1531
        %v1544 = vld [vmem:[#allocation13] sm:$0xf]
        %v1545 = vld [vmem:[#allocation13 + $0x4] sm:$0xf]
        %v1546 = vld [vmem:[#allocation13 + $0x8] sm:$0xf]
        %v1547 = vld [vmem:[#allocation13 + $0xc] sm:$0xf]
        %v1548 = vld [vmem:[#allocation13 + $0x10] sm:$0xf]
        %v1549 = vld [vmem:[#allocation13 + $0x14] sm:$0xf]
        %v1550 = vld [vmem:[#allocation13 + $0x18] sm:$0xf]
        %v1551 = vld [vmem:[#allocation13 + $0x1c] sm:$0xf]
        %v1552 = vld [vmem:[#allocation13 + $0x20] sm:$0xf]
        %v1553 = vld [vmem:[#allocation13 + $0x24] sm:$0xf]
        %v1554 = vld [vmem:[#allocation13 + $0x28] sm:$0xf]
        %v1555 = vld [vmem:[#allocation13 + $0x2c] sm:$0xf]
        %v1556 = vld [vmem:[#allocation13 + $0x30] sm:$0xf]
        %v1557 = vld [vmem:[#allocation13 + $0x34] sm:$0xf]
        %v1558 = vld [vmem:[#allocation13 + $0x38] sm:$0xf]
        %v1559 = vld [vmem:[#allocation13 + $0x3c] sm:$0xf]
        %v1560 = vld [vmem:[#allocation13 + $0x40] sm:$0xf]
        %v1561 = vld [vmem:[#allocation13 + $0x44] sm:$0xf]
        %v1562 = vld [vmem:[#allocation13 + $0x48] sm:$0xf]
        %v1563 = vld [vmem:[#allocation13 + $0x4c] sm:$0xf]
        %v1564 = vld [vmem:[#allocation13 + $0x50] sm:$0xf]
        %v1565 = vld [vmem:[#allocation13 + $0x54] sm:$0xf]
        %v1566 = vld [vmem:[#allocation13 + $0x58] sm:$0xf]
        %v1567 = vld [vmem:[#allocation13 + $0x5c] sm:$0xf]
        %v1568 = vld [vmem:[#allocation13 + $0x60] sm:$0xf]
        %v1569 = vld [vmem:[#allocation13 + $0x64] sm:$0xf]
        %v1570 = vld [vmem:[#allocation13 + $0x68] sm:$0xf]
        %v1571 = vld [vmem:[#allocation13 + $0x6c] sm:$0xf]
        %v1572 = vld [vmem:[#allocation13 + $0x70] sm:$0xf]
        %v1573 = vld [vmem:[#allocation13 + $0x74] sm:$0xf]
        %v1574 = vld [vmem:[#allocation13 + $0x78] sm:$0xf]
        %v1575 = vld [vmem:[#allocation13 + $0x7c] sm:$0xf]
        %v1576 = vld [vmem:[#allocation13 + $0x80] sm:$0xf]
        %v1577 = vld [vmem:[#allocation13 + $0x84] sm:$0xf]
        %v1578 = vld [vmem:[#allocation13 + $0x88] sm:$0xf]
        %v1579 = vld [vmem:[#allocation13 + $0x8c] sm:$0xf]
        %v1580 = vld [vmem:[#allocation13 + $0x90] sm:$0xf]
        %v1581 = vld [vmem:[#allocation13 + $0x94] sm:$0xf]
        %v1582 = vld [vmem:[#allocation13 + $0x98] sm:$0xf]
        %v1583 = vld [vmem:[#allocation13 + $0x9c] sm:$0xf]
        %v1584 = vld [vmem:[#allocation13 + $0xa0] sm:$0xf]
        %v1585 = vld [vmem:[#allocation13 + $0xa4] sm:$0xf]
        %v1586 = vld [vmem:[#allocation13 + $0xa8] sm:$0xf]
        %v1587 = vld [vmem:[#allocation13 + $0xac] sm:$0xf]
        %v1588 = vld [vmem:[#allocation13 + $0xb0] sm:$0xf]
        %v1589 = vld [vmem:[#allocation13 + $0xb4] sm:$0xf]
        %v1590 = vld [vmem:[#allocation13 + $0xb8] sm:$0xf]
        %v1591 = vld [vmem:[#allocation13 + $0xbc] sm:$0xf]
        %v1592 = vld [vmem:[#allocation13 + $0xc0] sm:$0xf]
        %v1593 = vld [vmem:[#allocation13 + $0xc4] sm:$0xf]
        %v1594 = vld [vmem:[#allocation13 + $0xc8] sm:$0xf]
        %v1595 = vld [vmem:[#allocation13 + $0xcc] sm:$0xf]
        %v1596 = vld [vmem:[#allocation13 + $0xd0] sm:$0xf]
        %v1597 = vld [vmem:[#allocation13 + $0xd4] sm:$0xf]
        %v1598 = vld [vmem:[#allocation13 + $0xd8] sm:$0xf]
        %v1599 = vld [vmem:[#allocation13 + $0xdc] sm:$0xf]
        %v1600 = vld [vmem:[#allocation13 + $0xe0] sm:$0xf]
        %v1601 = vld [vmem:[#allocation13 + $0xe4] sm:$0xf]
        %v1602 = vld [vmem:[#allocation13 + $0xe8] sm:$0xf]
        %v1603 = vld [vmem:[#allocation13 + $0xec] sm:$0xf]
        %v1604 = vld [vmem:[#allocation13 + $0xf0] sm:$0xf]
        %v1605 = vld [vmem:[#allocation13 + $0xf4] sm:$0xf]
        %v1606 = vld [vmem:[#allocation13 + $0xf8] sm:$0xf]
        %v1607 = vld [vmem:[#allocation13 + $0xfc] sm:$0xf]
        %v1608 = vld [vmem:[%s10] sm:$0x1]
        %v1610 = vlaneseq
        %v1611 = vshrl.u32 %v1610, 7
        %v1612 = vsub.s32 0, %v1611
        %v1613 = vrot.slane %v1608, %v1612
        %v1679 = vunpack.c.l.b16 %v1544
        %v1680 = vunpack.c.l.b16 %v1545
        %v1681 = vunpack.c.l.b16 %v1546
        %v1682 = vunpack.c.l.b16 %v1547
        %v1683 = vunpack.c.l.b16 %v1548
        %v1684 = vunpack.c.l.b16 %v1549
        %v1685 = vunpack.c.l.b16 %v1550
        %v1686 = vunpack.c.l.b16 %v1551
        %v1687 = vunpack.c.l.b16 %v1552
        %v1688 = vunpack.c.l.b16 %v1553
        %v1689 = vunpack.c.l.b16 %v1554
        %v1690 = vunpack.c.l.b16 %v1555
        %v1691 = vunpack.c.l.b16 %v1556
        %v1692 = vunpack.c.l.b16 %v1557
        %v1693 = vunpack.c.l.b16 %v1558
        %v1694 = vunpack.c.l.b16 %v1559
        %v1695 = vunpack.c.l.b16 %v1560
        %v1696 = vunpack.c.l.b16 %v1561
        %v1697 = vunpack.c.l.b16 %v1562
        %v1698 = vunpack.c.l.b16 %v1563
        %v1699 = vunpack.c.l.b16 %v1564
        %v1700 = vunpack.c.l.b16 %v1565
        %v1701 = vunpack.c.l.b16 %v1566
        %v1702 = vunpack.c.l.b16 %v1567
        %v1703 = vunpack.c.l.b16 %v1568
        %v1704 = vunpack.c.l.b16 %v1569
        %v1705 = vunpack.c.l.b16 %v1570
        %v1706 = vunpack.c.l.b16 %v1571
        %v1707 = vunpack.c.l.b16 %v1572
        %v1708 = vunpack.c.l.b16 %v1573
        %v1709 = vunpack.c.l.b16 %v1574
        %v1710 = vunpack.c.l.b16 %v1575
        %v1711 = vunpack.c.l.b16 %v1576
        %v1712 = vunpack.c.l.b16 %v1577
        %v1713 = vunpack.c.l.b16 %v1578
        %v1714 = vunpack.c.l.b16 %v1579
        %v1715 = vunpack.c.l.b16 %v1580
        %v1716 = vunpack.c.l.b16 %v1581
        %v1717 = vunpack.c.l.b16 %v1582
        %v1718 = vunpack.c.l.b16 %v1583
        %v1719 = vunpack.c.l.b16 %v1584
        %v1720 = vunpack.c.l.b16 %v1585
        %v1721 = vunpack.c.l.b16 %v1586
        %v1722 = vunpack.c.l.b16 %v1587
        %v1723 = vunpack.c.l.b16 %v1588
        %v1724 = vunpack.c.l.b16 %v1589
        %v1725 = vunpack.c.l.b16 %v1590
        %v1726 = vunpack.c.l.b16 %v1591
        %v1727 = vunpack.c.l.b16 %v1592
        %v1728 = vunpack.c.l.b16 %v1593
        %v1729 = vunpack.c.l.b16 %v1594
        %v1730 = vunpack.c.l.b16 %v1595
        %v1731 = vunpack.c.l.b16 %v1596
        %v1732 = vunpack.c.l.b16 %v1597
        %v1733 = vunpack.c.l.b16 %v1598
        %v1734 = vunpack.c.l.b16 %v1599
        %v1735 = vunpack.c.l.b16 %v1600
        %v1736 = vunpack.c.l.b16 %v1601
        %v1737 = vunpack.c.l.b16 %v1602
        %v1738 = vunpack.c.l.b16 %v1603
        %v1739 = vunpack.c.l.b16 %v1604
        %v1740 = vunpack.c.l.b16 %v1605
        %v1741 = vunpack.c.l.b16 %v1606
        %v1742 = vunpack.c.l.b16 %v1607
        %v1743 = vpack.c.b16 %v1680, %v1679
        %v1744 = vpack.c.b16 %v1682, %v1681
        %v1745 = vpack.c.b16 %v1684, %v1683
        %v1746 = vpack.c.b16 %v1686, %v1685
        %v1747 = vpack.c.b16 %v1688, %v1687
        %v1748 = vpack.c.b16 %v1690, %v1689
        %v1749 = vpack.c.b16 %v1692, %v1691
        %v1750 = vpack.c.b16 %v1694, %v1693
        %v1751 = vpack.c.b16 %v1696, %v1695
        %v1752 = vpack.c.b16 %v1698, %v1697
        %v1753 = vpack.c.b16 %v1700, %v1699
        %v1754 = vpack.c.b16 %v1702, %v1701
        %v1755 = vpack.c.b16 %v1704, %v1703
        %v1756 = vpack.c.b16 %v1706, %v1705
        %v1757 = vpack.c.b16 %v1708, %v1707
        %v1758 = vpack.c.b16 %v1710, %v1709
        %v1759 = vpack.c.b16 %v1712, %v1711
        %v1760 = vpack.c.b16 %v1714, %v1713
        %v1761 = vpack.c.b16 %v1716, %v1715
        %v1762 = vpack.c.b16 %v1718, %v1717
        %v1763 = vpack.c.b16 %v1720, %v1719
        %v1764 = vpack.c.b16 %v1722, %v1721
        %v1765 = vpack.c.b16 %v1724, %v1723
        %v1766 = vpack.c.b16 %v1726, %v1725
        %v1767 = vpack.c.b16 %v1728, %v1727
        %v1768 = vpack.c.b16 %v1730, %v1729
        %v1769 = vpack.c.b16 %v1732, %v1731
        %v1770 = vpack.c.b16 %v1734, %v1733
        %v1771 = vpack.c.b16 %v1736, %v1735
        %v1772 = vpack.c.b16 %v1738, %v1737
        %v1773 = vpack.c.b16 %v1740, %v1739
        %v1774 = vpack.c.b16 %v1742, %v1741
        %1807 = vmatprep.subr.bf16.mxu0 0
        %1808 = vmatpush1.bf16.msra.mxu0 %v1750
        %1809 = vmatprep.subr.bf16.mxu0 0
        %1810 = vmatpush1.bf16.msra.mxu0 %v1749
        %1811 = vmatprep.subr.bf16.mxu0 0
        %1812 = vmatpush1.bf16.msra.mxu0 %v1748
        %1813 = vmatprep.subr.bf16.mxu0 0
        %1814 = vmatpush1.bf16.msra.mxu0 %v1747
        %1815 = vmatprep.subr.bf16.mxu0 0
        %1816 = vmatpush1.bf16.msra.mxu0 %v1746
        %1817 = vmatprep.subr.bf16.mxu0 0
        %1818 = vmatpush1.bf16.msra.mxu0 %v1745
        %1819 = vmatprep.subr.bf16.mxu0 0
        %1820 = vmatpush1.bf16.msra.mxu0 %v1744
        %1821 = vmatprep.subr.bf16.mxu0 0
        %1822 = vmatpush1.bf16.msra.mxu0 %v1743
        %1823 = vmatprep.subr.bf16.mxu0 0
        %1824 = vmatpush2.bf16.msra.mxu0 %v1758
        %1825 = vmatprep.subr.bf16.mxu0 0
        %1826 = vmatpush2.bf16.msra.mxu0 %v1757
        %1827 = vmatprep.subr.bf16.mxu0 0
        %1828 = vmatpush2.bf16.msra.mxu0 %v1756
        %1829 = vmatprep.subr.bf16.mxu0 0
        %1830 = vmatpush2.bf16.msra.mxu0 %v1755
        %1831 = vmatprep.subr.bf16.mxu0 0
        %1832 = vmatpush2.bf16.msra.mxu0 %v1754
        %1833 = vmatprep.subr.bf16.mxu0 0
        %1834 = vmatpush2.bf16.msra.mxu0 %v1753
        %1835 = vmatprep.subr.bf16.mxu0 0
        %1836 = vmatpush2.bf16.msra.mxu0 %v1752
        %1837 = vmatprep.subr.bf16.mxu0 0
        %1838 = vmatpush2.bf16.msra.mxu0 %v1751
        %1839 = vmatprep.mubr.bf16.mxu0 %v1537
        %1840 = vmatmul.mubr.bf16.gmra.mxu0 %v1536
        %v1841 = vpop.f32.mrf.mxu0
        %v1842 = vadd.f32 %v1613, %v1841
        %v1843 = vpop.f32.mrf.mxu0
        %v1844 = vpop.f32.mrf.mxu0
        %v1845 = vadd.f32 %v1613, %v1844
        %v1846 = vpop.f32.mrf.mxu0
        %1847 = vmatprep.mubr.bf16.mxu0 %v1541
        %1848 = vmatmul.mubr.bf16.gmra.mxu0 %v1540
        %v1849 = vpop.f32.mrf.mxu0
        %v1850 = vadd.f32 %v1613, %v1849
        %v1851 = vpop.f32.mrf.mxu0
        %v1852 = vpop.f32.mrf.mxu0
        %v1853 = vadd.f32 %v1613, %v1852
        %v1854 = vpop.f32.mrf.mxu0
        %1855 = vdwg.mxu0
        %1856 = vmatprep.subr.bf16.mxu0 0
        %1857 = vmatpush1.bf16.msra.mxu0 %v1766
        %1858 = vmatprep.subr.bf16.mxu0 0
        %1859 = vmatpush1.bf16.msra.mxu0 %v1765
        %1860 = vmatprep.subr.bf16.mxu0 0
        %1861 = vmatpush1.bf16.msra.mxu0 %v1764
        %1862 = vmatprep.subr.bf16.mxu0 0
        %1863 = vmatpush1.bf16.msra.mxu0 %v1763
        %1864 = vmatprep.subr.bf16.mxu0 0
        %1865 = vmatpush1.bf16.msra.mxu0 %v1762
        %1866 = vmatprep.subr.bf16.mxu0 0
        %1867 = vmatpush1.bf16.msra.mxu0 %v1761
        %1868 = vmatprep.subr.bf16.mxu0 0
        %1869 = vmatpush1.bf16.msra.mxu0 %v1760
        %1870 = vmatprep.subr.bf16.mxu0 0
        %1871 = vmatpush1.bf16.msra.mxu0 %v1759
        %1872 = vmatprep.subr.bf16.mxu0 0
        %1873 = vmatpush2.bf16.msra.mxu0 %v1774
        %1874 = vmatprep.subr.bf16.mxu0 0
        %1875 = vmatpush2.bf16.msra.mxu0 %v1773
        %1876 = vmatprep.subr.bf16.mxu0 0
        %1877 = vmatpush2.bf16.msra.mxu0 %v1772
        %1878 = vmatprep.subr.bf16.mxu0 0
        %1879 = vmatpush2.bf16.msra.mxu0 %v1771
        %1880 = vmatprep.subr.bf16.mxu0 0
        %1881 = vmatpush2.bf16.msra.mxu0 %v1770
        %1882 = vmatprep.subr.bf16.mxu0 0
        %1883 = vmatpush2.bf16.msra.mxu0 %v1769
        %1884 = vmatprep.subr.bf16.mxu0 0
        %1885 = vmatpush2.bf16.msra.mxu0 %v1768
        %1886 = vmatprep.subr.bf16.mxu0 0
        %1887 = vmatpush2.bf16.msra.mxu0 %v1767
        %1888 = vmatprep.mubr.bf16.mxu0 %v1539
        %1889 = vmatmul.mubr.bf16.gmra.mxu0 %v1538
        %v1890 = vpop.f32.mrf.mxu0
        %v1891 = vadd.f32 %v1842, %v1890
        %v1892 = vpop.f32.mrf.mxu0
        %v1893 = vpop.f32.mrf.mxu0
        %v1894 = vadd.f32 %v1845, %v1893
        %v1895 = vpop.f32.mrf.mxu0
        %1896 = vmatprep.mubr.bf16.mxu0 %v1543
        %1897 = vmatmul.mubr.bf16.gmra.mxu0 %v1542
        %v1898 = vpop.f32.mrf.mxu0
        %v1899 = vadd.f32 %v1850, %v1898
        %v1900 = vpop.f32.mrf.mxu0
        %v1901 = vpop.f32.mrf.mxu0
        %v1902 = vadd.f32 %v1853, %v1901
        %v1903 = vpop.f32.mrf.mxu0
        %1904 = vdwg.mxu0
        %v1905 = vmax.f32 %v1891, 0.0
        %v1906 = vmax.f32 %v1894, 0.0
        %v1907 = vmax.f32 %v1899, 0.0
        %v1908 = vmax.f32 %v1902, 0.0
        %1909 = vadd.xlane.f32.xlu0 %v1905
        %v1910 = vpop.xlane.xlu0 %1909
        %1911 = vadd.xlane.f32.xlu0 %v1906
        %v1912 = vpop.xlane.xlu0 %1911
        %1913 = vadd.xlane.f32.xlu0 %v1907
        %v1914 = vpop.xlane.xlu0 %1913
        %1915 = vadd.xlane.f32.xlu0 %v1908
        %v1916 = vpop.xlane.xlu0 %1915
        %v1917 = vrcp.pop 128.0
        %v1918 = vmul.f32 %v1910, %v1917
        %v1919 = vmul.f32 %v1912, %v1917
        %v1920 = vmul.f32 %v1914, %v1917
        %v1921 = vmul.f32 %v1916, %v1917
        %v1922 = vsub.f32 %v1905, %v1918
        %v1923 = vsub.f32 %v1906, %v1919
        %v1924 = vsub.f32 %v1907, %v1920
        %v1925 = vsub.f32 %v1908, %v1921
        %v1926 = vmul.f32 %v1922, %v1922
        %v1927 = vmul.f32 %v1923, %v1923
        %v1928 = vmul.f32 %v1924, %v1924
        %v1929 = vmul.f32 %v1925, %v1925
        %1930 = vadd.xlane.f32.xlu0 %v1926
        %v1931 = vpop.xlane.xlu0 %1930
        %1932 = vadd.xlane.f32.xlu0 %v1927
        %v1933 = vpop.xlane.xlu0 %1932
        %1934 = vadd.xlane.f32.xlu0 %v1928
        %v1935 = vpop.xlane.xlu0 %1934
        %1936 = vadd.xlane.f32.xlu0 %v1929
        %v1937 = vpop.xlane.xlu0 %1936
        %v1938 = vmul.f32 %v1931, %v1917
        %v1939 = vmul.f32 %v1933, %v1917
        %v1940 = vmul.f32 %v1935, %v1917
        %v1941 = vmul.f32 %v1937, %v1917
        %v1942 = vadd.f32 %v1938, 1e-05
        %v1943 = vadd.f32 %v1939, 1e-05
        %v1944 = vadd.f32 %v1940, 1e-05
        %v1945 = vadd.f32 %v1941, 1e-05
        %v1946 = vrsqrt.pop %v1942
        %v1947 = vrsqrt.pop %v1943
        %v1948 = vrsqrt.pop %v1944
        %v1949 = vrsqrt.pop %v1945
        %v1950 = vmul.f32 %v1922, %v1946
        %v1951 = vmul.f32 %v1923, %v1947
        %v1952 = vmul.f32 %v1924, %v1948
        %v1953 = vmul.f32 %v1925, %v1949
        %v1954 = vld [vmem:[%s11] sm:$0x1]
        %v1956 = vlaneseq
        %v1957 = vshrl.u32 %v1956, 7
        %v1958 = vsub.s32 0, %v1957
        %v1959 = vrot.slane %v1954, %v1958
        %v1961 = vmul.f32 %v1950, %v1959
        %v1962 = vmul.f32 %v1951, %v1959
        %v1963 = vmul.f32 %v1952, %v1959
        %v1964 = vmul.f32 %v1953, %v1959
        %v1965 = vld [vmem:[%s12] sm:$0x1]
        %v1967 = vlaneseq
        %v1968 = vshrl.u32 %v1967, 7
        %v1969 = vsub.s32 0, %v1968
        %v1970 = vrot.slane %v1965, %v1969
        %v1972 = vadd.f32 %v1961, %v1970
        %v1973 = vadd.f32 %v1962, %v1970
        %v1974 = vadd.f32 %v1963, %v1970
        %v1975 = vadd.f32 %v1964, %v1970
        %1976 = vst [vmem:[%s539] sm:$0xff] %v1972
        %1977 = vst [vmem:[%s539 + $0x8] sm:$0xff] %v1973
        %1978 = vst [vmem:[%s539 + $0x10] sm:$0xff] %v1974
        %1979 = vst [vmem:[%s539 + $0x18] sm:$0xff] %v1975
        %s1980 = sand.u32 %s319, 1
        %s1981 = scalar_lea.sflag [#allocation4], %s1980
        %s1982 = sand.u32 %s319, 1
        %s1983 = smul.addr %s1982, 32
        %s1984 = scalar_lea.vmem [#allocation14], %s1983
        // Predicated region
        $region101: #{tpu_custom_call.1} parent=71 // pred_check
          %p1985 = pneg %p329
        $region102: #{tpu_custom_call.1} parent=71 // pred_check_branch
          %1987 = sbr.rel (%p1985) target = $region104
        $region103: #{tpu_custom_call.1} parent=71 // pred_region
          %s1988 = smul.u32 4, %s33
          %s1990 = ssub.s32 512, 512
          %1991 = vsyncadd %s1981, %s1990
          %s1992 = smul.addr %s1988, 128
          %s1993 = scalar_lea.hbm %s13, %s1992
          %s1994 = sshll.u32 %s1984, 4
          %s1995 = int_to_ptr.vmem [resolvable:$true] %s1994
          %2000 = dma.vmem_to_hbm [thread:$0]  %s1995, 512, %s1993, %s1981, 128, 128, 8
        $region104: #{tpu_custom_call.1} parent=71 // pred_fallthru
          _
      $region72: #{tpu_custom_call.1} parent=5 // pred_fallthru
        _
      %p2001 = scmp.le.s32.totalorder 2, %s28
      // Predicated region
      $region105: #{tpu_custom_call.1} parent=5 // pred_check
        %p2002 = pneg %p2001
      $region106: #{tpu_custom_call.1} parent=5 // pred_check_branch
        %2004 = sbr.rel (%p2002) target = $region108
      $region107: #{tpu_custom_call.1} parent=5 // pred_region
        %s2005 = ssub.s32 %s28, 2
        // Predicated region
        $region109: #{tpu_custom_call.1} parent=107 // pred_check
          %p2006 = pneg %p335
        $region110: #{tpu_custom_call.1} parent=107 // pred_check_branch
          %2008 = sbr.rel (%p2006) target = $region112
        $region111: #{tpu_custom_call.1} parent=107 // pred_region
          %s2009 = sand.u32 %s320, 1
          %s2010 = scalar_lea.sflag [#allocation4], %s2009
          %s2011 = sand.u32 %s320, 1
          %s2012 = smul.addr %s2011, 32
          %s2013 = scalar_lea.vmem [#allocation14], %s2012
          %2014 = dma.done %s2010, 512
        $region112: #{tpu_custom_call.1} parent=107 // pred_fallthru
          _
      $region108: #{tpu_custom_call.1} parent=5 // pred_fallthru
        _
    $region6: #{tpu_custom_call.1} parent=1 // loop_footer
      %s32 = sadd.s32 1, %s28
    $region7: #{tpu_custom_call.1} parent=1 // loop_footer_branch
      %27 = sbr.rel target = $region3
    $region8: #{tpu_custom_call.1} parent=1 // loop_exit
      _
    %2015 = vsyncpa [#allocation3], 1
    %s2016 = scalar_lea.sflag [#allocation3], 1
    %2017 = vsyncpa %s2016, 1
    %2018 = vsyncpa [#allocation6], 1
    %2019 = vsyncpa [#allocation9], 1
    %2020 = vsyncpa [#allocation12], 1
    %2021 = vsyncpa [#allocation4], 1
    %s2022 = scalar_lea.sflag [#allocation4], 1
    %2023 = vsyncpa %s2022, 1

</llo_original>
